<compile_context>
chip_gen: v7x
topology: tpu7x:2x2x1
jax: 0.10.0
libtpu: 0.0.40
codegen_flags: <defaults>
</compile_context>

<pallas_src>
import math
import functools

import jax
import jax.numpy as jnp
from jax import lax
from jax.experimental import pallas as pl
from jax.experimental.pallas import tpu as pltpu


def _bert_attn_skip_kernel(xq_ref, xkv_ref, mask_ref,
                           wq_ref, wk_ref, wv_ref, wo_ref,
                           gamma_ref, beta_ref, o_ref, ctx_ref,
                           *, num_heads, head_size, eps):
    # xq_ref:   (1, tq, H)  query rows of this grid step (also the residual input)
    # xkv_ref:  (1, S,  H)  full sequence for K/V
    # mask_ref: (1, M, tq, S) with M in {1, num_heads} (broadcast over heads if 1)
    # w*_ref:   (H, H)       pre-transposed (y = x @ w); wq pre-scaled by 1/sqrt(H)
    # gamma/beta: (1, H)
    # ctx_ref:  (tq, H)      VMEM scratch for the concatenated per-head context
    dt = xq_ref.dtype
    xq = xq_ref[0]                                     # (tq, H), compute dtype
    xkv = xkv_ref[0]                                   # (S, H)

    # Projections: MXU in the input dtype (bf16 fast path), f32 accumulation.
    q = jnp.dot(xq, wq_ref[...], preferred_element_type=jnp.float32).astype(dt)   # (tq, H)
    k = jnp.dot(xkv, wk_ref[...], preferred_element_type=jnp.float32).astype(dt)  # (S, H)
    v = jnp.dot(xkv, wv_ref[...], preferred_element_type=jnp.float32).astype(dt)  # (S, H)

    n_mask_heads = mask_ref.shape[1]                   # 1 or num_heads (static)

    # Per-head attention; num_heads is small and static.  No transposes, no concat.
    for h in range(num_heads):
        lo = h * head_size
        hi = lo + head_size
        qh = q[:, lo:hi]                               # (tq, d)
        kh = k[:, lo:hi]                               # (S, d)
        vh = v[:, lo:hi]                               # (S, d)

        # scores = qh @ kh^T, expressed as a contraction on d (no explicit .T).
        s = lax.dot_general(qh, kh, (((1,), (1,)), ((), ())),
                            preferred_element_type=jnp.float32)        # (tq, S)
        m = mask_ref[0, h if n_mask_heads > 1 else 0]                   # (tq, S)
        s = s + m.astype(jnp.float32)

        # numerically stable softmax over keys; denom via EUP approx reciprocal
        smax = jnp.max(s, axis=-1, keepdims=True)
        p = jnp.exp(s - smax)
        inv = pl.reciprocal(jnp.sum(p, axis=-1, keepdims=True), approx=True)
        attn = (p * inv).astype(dt)                                     # (tq, S)

        ctx_ref[:, lo:hi] = jnp.dot(
            attn, vh, preferred_element_type=jnp.float32).astype(ctx_ref.dtype)

    # Output projection on the full (tq, H) context slab (single lane-dense matmul).
    attn_out = jnp.dot(ctx_ref[...], wo_ref[...],
                       preferred_element_type=jnp.float32)              # (tq, H) f32

    # TODO(synk): nn.Dropout is identity in eval mode; training-mode dropout not implemented.

    # residual + LayerNorm over the hidden axis (f32 math)
    resid = xq.astype(jnp.float32) + attn_out
    mu = jnp.mean(resid, axis=-1, keepdims=True)
    var = jnp.mean(jnp.square(resid - mu), axis=-1, keepdims=True)
    y = (resid - mu) * lax.rsqrt(var + eps)
    y = y * gamma_ref[...].astype(jnp.float32) + beta_ref[...].astype(jnp.float32)

    o_ref[0] = y.astype(o_ref.dtype)


def bert_attention_with_skip(hidden_state, attention_mask, params, *,
                             num_heads, layernorm_eps=1e-12, q_block=None):
    """hidden_state: (B, S, H); attention_mask: (B*num_heads, S, S), (B, S, S) or (S, S)."""
    B, S, H = hidden_state.shape
    assert H % num_heads == 0
    head_size = H // num_heads
    dt = hidden_state.dtype

    if q_block is None:
        q_block = S
    assert S % q_block == 0 and (q_block == S or q_block % 8 == 0), \
        "q_block must divide S and be a multiple of 8 (or equal S)"
    nq = S // q_block

    # nn.Linear weight is (out, in); pre-transpose so kernel does x @ W_T.
    # Fold the 1/sqrt(hidden_size) softmax scale into Wq (PyTorch divides qk by sqrt(H)).
    scale = 1.0 / math.sqrt(H)
    wq_t = (params["wq"].astype(jnp.float32).T * scale).astype(dt)
    wk_t = params["wk"].T.astype(dt)
    wv_t = params["wv"].T.astype(dt)
    wo_t = params["wo"].T.astype(dt)
    gamma = params["gamma"].reshape(1, H)
    beta = params["beta"].reshape(1, H)

    # Normalize the additive mask to (Bm, M, S, S), Bm in {1, B}, M in {1, num_heads}.
    m = attention_mask
    if m.ndim == 2:
        m = m.reshape(1, 1, S, S)
    elif m.ndim == 3:
        if m.shape[0] == B * num_heads:
            m = m.reshape(B, num_heads, S, S)
        elif m.shape[0] == B:
            m = m.reshape(B, 1, S, S)
        elif m.shape[0] == 1:
            m = m.reshape(1, 1, S, S)
        else:
            raise ValueError(f"unsupported mask shape {attention_mask.shape}")
    assert m.ndim == 4 and m.shape[2:] == (S, S)
    Bm, M = m.shape[0], m.shape[1]
    assert Bm in (1, B) and M in (1, num_heads)

    if Bm == B:
        mask_map = lambda b, qi: (b, 0, qi, 0)
    else:
        mask_map = lambda b, qi: (0, 0, qi, 0)

    kernel = functools.partial(
        _bert_attn_skip_kernel,
        num_heads=num_heads, head_size=head_size, eps=layernorm_eps,
    )

    w_spec = pl.BlockSpec((H, H), lambda b, qi: (0, 0))
    v_spec = pl.BlockSpec((1, H), lambda b, qi: (0, 0))

    out = pl.pallas_call(
        kernel,
        out_shape=jax.ShapeDtypeStruct((B, S, H), dt),
        grid_spec=pltpu.PrefetchScalarGridSpec(
            num_scalar_prefetch=0,
            grid=(B, nq),
            in_specs=[
                pl.BlockSpec((1, q_block, H), lambda b, qi: (b, qi, 0)),   # x (query rows / residual)
                pl.BlockSpec((1, S, H), lambda b, qi: (b, 0, 0)),          # x (full seq for K/V)
                pl.BlockSpec((1, M, q_block, S), mask_map),                # additive mask
                w_spec, w_spec, w_spec, w_spec,                            # Wq^T*scale, Wk^T, Wv^T, Wo^T
                v_spec, v_spec,                                            # gamma, beta
            ],
            out_specs=pl.BlockSpec((1, q_block, H), lambda b, qi: (b, qi, 0)),
            scratch_shapes=[pltpu.VMEM((q_block, H), dt)],                 # context slab
        ),
        compiler_params=pltpu.CompilerParams(
            dimension_semantics=("parallel", "parallel"),
            vmem_limit_bytes=32 * 1024 * 1024,
        ),
    )(hidden_state, hidden_state, m, wq_t, wk_t, wv_t, wo_t, gamma, beta)
    return out


def _reference(hidden_state, attention_mask, params, *, num_heads, eps=1e-12):
    """Pure-JAX f32 reference mirroring the PyTorch forward (eval mode)."""
    B, S, H = hidden_state.shape
    d = H // num_heads
    x = hidden_state.astype(jnp.float32)

    def split_heads(t):
        t = t.reshape(B, S, num_heads, d)
        t = jnp.transpose(t, (0, 2, 1, 3))
        return t.reshape(B * num_heads, S, d)

    q = split_heads(x @ params["wq"].T)
    k = split_heads(x @ params["wk"].T)
    v = split_heads(x @ params["wv"].T)

    qk = jnp.einsum("bqd,bkd->bqk", q, k) / math.sqrt(H) + attention_mask
    attn = jax.nn.softmax(qk, axis=-1)
    vs = jnp.einsum("bqk,bkd->bqd", attn, v)
    vs = vs.reshape(B, num_heads, S, d).transpose(0, 2, 1, 3).reshape(B, S, H)
    out = vs @ params["wo"].T

    resid = x + out
    mu = resid.mean(-1, keepdims=True)
    var = ((resid - mu) ** 2).mean(-1, keepdims=True)
    return ((resid - mu) / jnp.sqrt(var + eps)) * params["gamma"] + params["beta"]


if __name__ == "__main__":
    # Small BertConfig-like setup: hidden=32, heads=4 (head_size=8), seq=16, batch=2.
    B, S, H, NH = 2, 16, 32, 4
    EPS = 1e-12

    key = jax.random.PRNGKey(0)
    k_x, k_m, kq, kk, kv, ko, kg, kb = jax.random.split(key, 8)

    hidden_state = jax.random.normal(k_x, (B, S, H), dtype=jnp.float32)
    # Additive attention mask, broadcastable to (B*NH, S, S) just like PyTorch.
    attention_mask = jnp.where(
        jax.random.uniform(k_m, (B * NH, S, S)) > 0.9, -1e9, 0.0
    ).astype(jnp.float32)

    wscale = 1.0 / math.sqrt(H)
    params = {
        "wq": jax.random.normal(kq, (H, H), dtype=jnp.float32) * wscale,
        "wk": jax.random.normal(kk, (H, H), dtype=jnp.float32) * wscale,
        "wv": jax.random.normal(kv, (H, H), dtype=jnp.float32) * wscale,
        "wo": jax.random.normal(ko, (H, H), dtype=jnp.float32) * wscale,
        "gamma": jnp.ones((H,), dtype=jnp.float32)
                 + 0.1 * jax.random.normal(kg, (H,), dtype=jnp.float32),
        "beta": 0.1 * jax.random.normal(kb, (H,), dtype=jnp.float32),
    }

    # --- Test 1: f32, faithful per-head additive mask, single q tile -----------
    out1 = bert_attention_with_skip(hidden_state, attention_mask, params,
                                    num_heads=NH, layernorm_eps=EPS)
    out1 = jax.block_until_ready(out1)
    ref1 = _reference(hidden_state, attention_mask, params, num_heads=NH, eps=EPS)
    assert out1.shape == (B, S, H)
    assert jnp.allclose(out1, ref1, atol=5e-3, rtol=5e-3), \
        f"max abs err {jnp.max(jnp.abs(out1 - ref1))}"

    # --- Test 2: compact per-batch mask + query tiling (grid = (B, S//8)) ------
    mask_compact = jnp.where(
        jax.random.uniform(k_m, (B, S, S)) > 0.9, -1e9, 0.0
    ).astype(jnp.float32)
    out2 = bert_attention_with_skip(hidden_state, mask_compact, params,
                                    num_heads=NH, layernorm_eps=EPS, q_block=8)
    out2 = jax.block_until_ready(out2)
    ref2 = _reference(hidden_state, jnp.repeat(mask_compact, NH, axis=0),
                      params, num_heads=NH, eps=EPS)
    assert jnp.allclose(out2, ref2, atol=5e-3, rtol=5e-3), \
        f"max abs err {jnp.max(jnp.abs(out2 - ref2))}"

    # --- Test 3: bf16 fast path (bf16 MXU inputs, f32 accumulation / softmax / LN)
    hidden_bf = hidden_state.astype(jnp.bfloat16)
    params_bf = {kk_: vv.astype(jnp.bfloat16) for kk_, vv in params.items()}
    out3 = bert_attention_with_skip(hidden_bf, attention_mask, params_bf,
                                    num_heads=NH, layernorm_eps=EPS)
    out3 = jax.block_until_ready(out3)
    ref3 = _reference(hidden_bf.astype(jnp.float32), attention_mask,
                      {kk_: vv.astype(jnp.float32) for kk_, vv in params_bf.items()},
                      num_heads=NH, eps=EPS)
    assert jnp.allclose(out3.astype(jnp.float32), ref3, atol=8e-2, rtol=8e-2), \
        f"max abs err {jnp.max(jnp.abs(out3.astype(jnp.float32) - ref3))}"

    print("KERNEL_OK")
</pallas_src>

<mosaic_0001>
module attributes {stable_mosaic.version = 11 : i64} {
  func.func @_bert_attn_skip_kernel(%arg0: i32, %arg1: i32, %arg2: memref<1x16x32xf32, #tpu.memory_space<vmem>>, %arg3: memref<1x16x32xf32, #tpu.memory_space<vmem>>, %arg4: memref<1x4x16x16xf32, #tpu.memory_space<vmem>>, %arg5: memref<32x32xf32, #tpu.memory_space<vmem>>, %arg6: memref<32x32xf32, #tpu.memory_space<vmem>>, %arg7: memref<32x32xf32, #tpu.memory_space<vmem>>, %arg8: memref<32x32xf32, #tpu.memory_space<vmem>>, %arg9: memref<1x32xf32, #tpu.memory_space<vmem>>, %arg10: memref<1x32xf32, #tpu.memory_space<vmem>>, %arg11: memref<1x16x32xf32, #tpu.memory_space<vmem>>, %arg12: memref<16x32xf32, #tpu.memory_space<vmem>>) attributes {dimension_semantics = [#tpu.dimension_semantics<parallel>, #tpu.dimension_semantics<parallel>], iteration_bounds = array<i64: 2, 1>, scalar_prefetch = 0 : i64, scratch_operands = 1 : i64, tpu.core_type = #tpu.core_type<tc>, window_params = [{transform_indices = @transform_0, window_bounds = array<i64: 1, 16, 32>}, {transform_indices = @transform_1, window_bounds = array<i64: 1, 16, 32>}, {transform_indices = @transform_2, window_bounds = array<i64: 1, 4, 16, 16>}, {pipeline_mode = #tpu.pipeline_mode<synchronous>, transform_indices = @transform_3, window_bounds = array<i64: 32, 32>}, {pipeline_mode = #tpu.pipeline_mode<synchronous>, transform_indices = @transform_4, window_bounds = array<i64: 32, 32>}, {pipeline_mode = #tpu.pipeline_mode<synchronous>, transform_indices = @transform_5, window_bounds = array<i64: 32, 32>}, {pipeline_mode = #tpu.pipeline_mode<synchronous>, transform_indices = @transform_6, window_bounds = array<i64: 32, 32>}, {pipeline_mode = #tpu.pipeline_mode<synchronous>, transform_indices = @transform_7, window_bounds = array<i64: 1, 32>}, {pipeline_mode = #tpu.pipeline_mode<synchronous>, transform_indices = @transform_8, window_bounds = array<i64: 1, 32>}, {transform_indices = @transform_9, window_bounds = array<i64: 1, 16, 32>}]} {
    %c0 = arith.constant 0 : index
    %c0_0 = arith.constant 0 : index
    %c0_1 = arith.constant 0 : index
    %0 = vector.load %arg2[%c0, %c0_0, %c0_1] : memref<1x16x32xf32, #tpu.memory_space<vmem>>, vector<1x16x32xf32>
    %1 = vector.shape_cast %0 : vector<1x16x32xf32> to vector<16x32xf32>
    %c0_2 = arith.constant 0 : index
    %c0_3 = arith.constant 0 : index
    %c0_4 = arith.constant 0 : index
    %2 = vector.load %arg3[%c0_2, %c0_3, %c0_4] : memref<1x16x32xf32, #tpu.memory_space<vmem>>, vector<1x16x32xf32>
    %3 = vector.shape_cast %2 : vector<1x16x32xf32> to vector<16x32xf32>
    %c0_5 = arith.constant 0 : index
    %c0_6 = arith.constant 0 : index
    %4 = vector.load %arg5[%c0_5, %c0_6] : memref<32x32xf32, #tpu.memory_space<vmem>>, vector<32x32xf32>
    %cst = arith.constant dense<0.000000e+00> : vector<16x32xf32>
    %5 = tpu.matmul %1, %4, %cst {dimension_numbers = #tpu.dot_dimension_numbers<[1], [0], [0], [1], [0, 0, 1, 1], [], []>} : vector<16x32xf32>, vector<32x32xf32>, vector<16x32xf32> -> vector<16x32xf32>
    %c0_7 = arith.constant 0 : index
    %c0_8 = arith.constant 0 : index
    %6 = vector.load %arg6[%c0_7, %c0_8] : memref<32x32xf32, #tpu.memory_space<vmem>>, vector<32x32xf32>
    %cst_9 = arith.constant dense<0.000000e+00> : vector<16x32xf32>
    %7 = tpu.matmul %3, %6, %cst_9 {dimension_numbers = #tpu.dot_dimension_numbers<[1], [0], [0], [1], [0, 0, 1, 1], [], []>} : vector<16x32xf32>, vector<32x32xf32>, vector<16x32xf32> -> vector<16x32xf32>
    %c0_10 = arith.constant 0 : index
    %c0_11 = arith.constant 0 : index
    %8 = vector.load %arg7[%c0_10, %c0_11] : memref<32x32xf32, #tpu.memory_space<vmem>>, vector<32x32xf32>
    %cst_12 = arith.constant dense<0.000000e+00> : vector<16x32xf32>
    %9 = tpu.matmul %3, %8, %cst_12 {dimension_numbers = #tpu.dot_dimension_numbers<[1], [0], [0], [1], [0, 0, 1, 1], [], []>} : vector<16x32xf32>, vector<32x32xf32>, vector<16x32xf32> -> vector<16x32xf32>
    %10 = vector.extract_strided_slice %5 {offsets = [0, 0], sizes = [16, 8], strides = [1, 1]} : vector<16x32xf32> to vector<16x8xf32>
    %11 = vector.extract_strided_slice %7 {offsets = [0, 0], sizes = [16, 8], strides = [1, 1]} : vector<16x32xf32> to vector<16x8xf32>
    %12 = vector.extract_strided_slice %9 {offsets = [0, 0], sizes = [16, 8], strides = [1, 1]} : vector<16x32xf32> to vector<16x8xf32>
    %cst_13 = arith.constant dense<0.000000e+00> : vector<16x16xf32>
    %13 = tpu.matmul %10, %11, %cst_13 {dimension_numbers = #tpu.dot_dimension_numbers<[1], [1], [0], [0], [0, 0, 1, 0], [], []>} : vector<16x8xf32>, vector<16x8xf32>, vector<16x16xf32> -> vector<16x16xf32>
    %c0_14 = arith.constant 0 : index
    %c0_15 = arith.constant 0 : index
    %c0_16 = arith.constant 0 : index
    %c0_17 = arith.constant 0 : index
    %14 = vector.load %arg4[%c0_14, %c0_15, %c0_16, %c0_17] : memref<1x4x16x16xf32, #tpu.memory_space<vmem>>, vector<1x1x16x16xf32>
    %15 = vector.shape_cast %14 : vector<1x1x16x16xf32> to vector<16x16xf32>
    %16 = arith.addf %13, %15 : vector<16x16xf32>
    %cst_18 = arith.constant dense<0xFF800000> : vector<16xf32>
    %17 = vector.multi_reduction <maximumf>, %16, %cst_18 [1] : vector<16x16xf32> to vector<16xf32>
    %18 = vector.shape_cast %17 : vector<16xf32> to vector<16x1xf32>
    %19 = vector.broadcast %18 : vector<16x1xf32> to vector<16x16xf32>
    %20 = arith.subf %16, %19 : vector<16x16xf32>
    %21 = math.exp %20 : vector<16x16xf32>
    %cst_19 = arith.constant dense<0.000000e+00> : vector<16xf32>
    %22 = vector.multi_reduction <add>, %21, %cst_19 [1] : vector<16x16xf32> to vector<16xf32>
    %23 = vector.shape_cast %22 : vector<16xf32> to vector<16x1xf32>
    %24 = tpu.reciprocal %23 {approx = true} : vector<16x1xf32> -> vector<16x1xf32>
    %25 = vector.broadcast %24 : vector<16x1xf32> to vector<16x16xf32>
    %26 = arith.mulf %21, %25 : vector<16x16xf32>
    %cst_20 = arith.constant dense<0.000000e+00> : vector<16x8xf32>
    %27 = tpu.matmul %26, %12, %cst_20 {dimension_numbers = #tpu.dot_dimension_numbers<[1], [0], [0], [1], [0, 0, 1, 1], [], []>} : vector<16x16xf32>, vector<16x8xf32>, vector<16x8xf32> -> vector<16x8xf32>
    %c0_21 = arith.constant 0 : index
    %c0_22 = arith.constant 0 : index
    %28 = vector.load %arg12[%c0_21, %c0_22] : memref<16x32xf32, #tpu.memory_space<vmem>>, vector<16x8xf32>
    tpu.vector_store %arg12[%c0_21, %c0_22], %27 {strides = array<i32>} : memref<16x32xf32, #tpu.memory_space<vmem>>, vector<16x8xf32>,
    %29 = vector.extract_strided_slice %5 {offsets = [0, 8], sizes = [16, 8], strides = [1, 1]} : vector<16x32xf32> to vector<16x8xf32>
    %30 = vector.extract_strided_slice %7 {offsets = [0, 8], sizes = [16, 8], strides = [1, 1]} : vector<16x32xf32> to vector<16x8xf32>
    %31 = vector.extract_strided_slice %9 {offsets = [0, 8], sizes = [16, 8], strides = [1, 1]} : vector<16x32xf32> to vector<16x8xf32>
    %cst_23 = arith.constant dense<0.000000e+00> : vector<16x16xf32>
    %32 = tpu.matmul %29, %30, %cst_23 {dimension_numbers = #tpu.dot_dimension_numbers<[1], [1], [0], [0], [0, 0, 1, 0], [], []>} : vector<16x8xf32>, vector<16x8xf32>, vector<16x16xf32> -> vector<16x16xf32>
    %c0_24 = arith.constant 0 : index
    %c1 = arith.constant 1 : index
    %c0_25 = arith.constant 0 : index
    %c0_26 = arith.constant 0 : index
    %33 = vector.load %arg4[%c0_24, %c1, %c0_25, %c0_26] : memref<1x4x16x16xf32, #tpu.memory_space<vmem>>, vector<1x1x16x16xf32>
    %34 = vector.shape_cast %33 : vector<1x1x16x16xf32> to vector<16x16xf32>
    %35 = arith.addf %32, %34 : vector<16x16xf32>
    %cst_27 = arith.constant dense<0xFF800000> : vector<16xf32>
    %36 = vector.multi_reduction <maximumf>, %35, %cst_27 [1] : vector<16x16xf32> to vector<16xf32>
    %37 = vector.shape_cast %36 : vector<16xf32> to vector<16x1xf32>
    %38 = vector.broadcast %37 : vector<16x1xf32> to vector<16x16xf32>
    %39 = arith.subf %35, %38 : vector<16x16xf32>
    %40 = math.exp %39 : vector<16x16xf32>
    %cst_28 = arith.constant dense<0.000000e+00> : vector<16xf32>
    %41 = vector.multi_reduction <add>, %40, %cst_28 [1] : vector<16x16xf32> to vector<16xf32>
    %42 = vector.shape_cast %41 : vector<16xf32> to vector<16x1xf32>
    %43 = tpu.reciprocal %42 {approx = true} : vector<16x1xf32> -> vector<16x1xf32>
    %44 = vector.broadcast %43 : vector<16x1xf32> to vector<16x16xf32>
    %45 = arith.mulf %40, %44 : vector<16x16xf32>
    %cst_29 = arith.constant dense<0.000000e+00> : vector<16x8xf32>
    %46 = tpu.matmul %45, %31, %cst_29 {dimension_numbers = #tpu.dot_dimension_numbers<[1], [0], [0], [1], [0, 0, 1, 1], [], []>} : vector<16x16xf32>, vector<16x8xf32>, vector<16x8xf32> -> vector<16x8xf32>
    %c0_30 = arith.constant 0 : index
    %c8 = arith.constant 8 : index
    %47 = vector.load %arg12[%c0_30, %c8] : memref<16x32xf32, #tpu.memory_space<vmem>>, vector<16x8xf32>
    tpu.vector_store %arg12[%c0_30, %c8], %46 {strides = array<i32>} : memref<16x32xf32, #tpu.memory_space<vmem>>, vector<16x8xf32>,
    %48 = vector.extract_strided_slice %5 {offsets = [0, 16], sizes = [16, 8], strides = [1, 1]} : vector<16x32xf32> to vector<16x8xf32>
    %49 = vector.extract_strided_slice %7 {offsets = [0, 16], sizes = [16, 8], strides = [1, 1]} : vector<16x32xf32> to vector<16x8xf32>
    %50 = vector.extract_strided_slice %9 {offsets = [0, 16], sizes = [16, 8], strides = [1, 1]} : vector<16x32xf32> to vector<16x8xf32>
    %cst_31 = arith.constant dense<0.000000e+00> : vector<16x16xf32>
    %51 = tpu.matmul %48, %49, %cst_31 {dimension_numbers = #tpu.dot_dimension_numbers<[1], [1], [0], [0], [0, 0, 1, 0], [], []>} : vector<16x8xf32>, vector<16x8xf32>, vector<16x16xf32> -> vector<16x16xf32>
    %c0_32 = arith.constant 0 : index
    %c2 = arith.constant 2 : index
    %c0_33 = arith.constant 0 : index
    %c0_34 = arith.constant 0 : index
    %52 = vector.load %arg4[%c0_32, %c2, %c0_33, %c0_34] : memref<1x4x16x16xf32, #tpu.memory_space<vmem>>, vector<1x1x16x16xf32>
    %53 = vector.shape_cast %52 : vector<1x1x16x16xf32> to vector<16x16xf32>
    %54 = arith.addf %51, %53 : vector<16x16xf32>
    %cst_35 = arith.constant dense<0xFF800000> : vector<16xf32>
    %55 = vector.multi_reduction <maximumf>, %54, %cst_35 [1] : vector<16x16xf32> to vector<16xf32>
    %56 = vector.shape_cast %55 : vector<16xf32> to vector<16x1xf32>
    %57 = vector.broadcast %56 : vector<16x1xf32> to vector<16x16xf32>
    %58 = arith.subf %54, %57 : vector<16x16xf32>
    %59 = math.exp %58 : vector<16x16xf32>
    %cst_36 = arith.constant dense<0.000000e+00> : vector<16xf32>
    %60 = vector.multi_reduction <add>, %59, %cst_36 [1] : vector<16x16xf32> to vector<16xf32>
    %61 = vector.shape_cast %60 : vector<16xf32> to vector<16x1xf32>
    %62 = tpu.reciprocal %61 {approx = true} : vector<16x1xf32> -> vector<16x1xf32>
    %63 = vector.broadcast %62 : vector<16x1xf32> to vector<16x16xf32>
    %64 = arith.mulf %59, %63 : vector<16x16xf32>
    %cst_37 = arith.constant dense<0.000000e+00> : vector<16x8xf32>
    %65 = tpu.matmul %64, %50, %cst_37 {dimension_numbers = #tpu.dot_dimension_numbers<[1], [0], [0], [1], [0, 0, 1, 1], [], []>} : vector<16x16xf32>, vector<16x8xf32>, vector<16x8xf32> -> vector<16x8xf32>
    %c0_38 = arith.constant 0 : index
    %c16 = arith.constant 16 : index
    %66 = vector.load %arg12[%c0_38, %c16] : memref<16x32xf32, #tpu.memory_space<vmem>>, vector<16x8xf32>
    tpu.vector_store %arg12[%c0_38, %c16], %65 {strides = array<i32>} : memref<16x32xf32, #tpu.memory_space<vmem>>, vector<16x8xf32>,
    %67 = vector.extract_strided_slice %5 {offsets = [0, 24], sizes = [16, 8], strides = [1, 1]} : vector<16x32xf32> to vector<16x8xf32>
    %68 = vector.extract_strided_slice %7 {offsets = [0, 24], sizes = [16, 8], strides = [1, 1]} : vector<16x32xf32> to vector<16x8xf32>
    %69 = vector.extract_strided_slice %9 {offsets = [0, 24], sizes = [16, 8], strides = [1, 1]} : vector<16x32xf32> to vector<16x8xf32>
    %cst_39 = arith.constant dense<0.000000e+00> : vector<16x16xf32>
    %70 = tpu.matmul %67, %68, %cst_39 {dimension_numbers = #tpu.dot_dimension_numbers<[1], [1], [0], [0], [0, 0, 1, 0], [], []>} : vector<16x8xf32>, vector<16x8xf32>, vector<16x16xf32> -> vector<16x16xf32>
    %c0_40 = arith.constant 0 : index
    %c3 = arith.constant 3 : index
    %c0_41 = arith.constant 0 : index
    %c0_42 = arith.constant 0 : index
    %71 = vector.load %arg4[%c0_40, %c3, %c0_41, %c0_42] : memref<1x4x16x16xf32, #tpu.memory_space<vmem>>, vector<1x1x16x16xf32>
    %72 = vector.shape_cast %71 : vector<1x1x16x16xf32> to vector<16x16xf32>
    %73 = arith.addf %70, %72 : vector<16x16xf32>
    %cst_43 = arith.constant dense<0xFF800000> : vector<16xf32>
    %74 = vector.multi_reduction <maximumf>, %73, %cst_43 [1] : vector<16x16xf32> to vector<16xf32>
    %75 = vector.shape_cast %74 : vector<16xf32> to vector<16x1xf32>
    %76 = vector.broadcast %75 : vector<16x1xf32> to vector<16x16xf32>
    %77 = arith.subf %73, %76 : vector<16x16xf32>
    %78 = math.exp %77 : vector<16x16xf32>
    %cst_44 = arith.constant dense<0.000000e+00> : vector<16xf32>
    %79 = vector.multi_reduction <add>, %78, %cst_44 [1] : vector<16x16xf32> to vector<16xf32>
    %80 = vector.shape_cast %79 : vector<16xf32> to vector<16x1xf32>
    %81 = tpu.reciprocal %80 {approx = true} : vector<16x1xf32> -> vector<16x1xf32>
    %82 = vector.broadcast %81 : vector<16x1xf32> to vector<16x16xf32>
    %83 = arith.mulf %78, %82 : vector<16x16xf32>
    %cst_45 = arith.constant dense<0.000000e+00> : vector<16x8xf32>
    %84 = tpu.matmul %83, %69, %cst_45 {dimension_numbers = #tpu.dot_dimension_numbers<[1], [0], [0], [1], [0, 0, 1, 1], [], []>} : vector<16x16xf32>, vector<16x8xf32>, vector<16x8xf32> -> vector<16x8xf32>
    %c0_46 = arith.constant 0 : index
    %c24 = arith.constant 24 : index
    %85 = vector.load %arg12[%c0_46, %c24] : memref<16x32xf32, #tpu.memory_space<vmem>>, vector<16x8xf32>
    tpu.vector_store %arg12[%c0_46, %c24], %84 {strides = array<i32>} : memref<16x32xf32, #tpu.memory_space<vmem>>, vector<16x8xf32>,
    %c0_47 = arith.constant 0 : index
    %c0_48 = arith.constant 0 : index
    %86 = vector.load %arg12[%c0_47, %c0_48] : memref<16x32xf32, #tpu.memory_space<vmem>>, vector<16x32xf32>
    %c0_49 = arith.constant 0 : index
    %c0_50 = arith.constant 0 : index
    %87 = vector.load %arg8[%c0_49, %c0_50] : memref<32x32xf32, #tpu.memory_space<vmem>>, vector<32x32xf32>
    %cst_51 = arith.constant dense<0.000000e+00> : vector<16x32xf32>
    %88 = tpu.matmul %86, %87, %cst_51 {dimension_numbers = #tpu.dot_dimension_numbers<[1], [0], [0], [1], [0, 0, 1, 1], [], []>} : vector<16x32xf32>, vector<32x32xf32>, vector<16x32xf32> -> vector<16x32xf32>
    %89 = arith.addf %1, %88 : vector<16x32xf32>
    %cst_52 = arith.constant dense<0.000000e+00> : vector<16xf32>
    %90 = vector.multi_reduction <add>, %89, %cst_52 [1] : vector<16x32xf32> to vector<16xf32>
    %91 = vector.shape_cast %90 : vector<16xf32> to vector<16x1xf32>
    %cst_53 = arith.constant 3.200000e+01 : f32
    %92 = vector.broadcast %cst_53 : f32 to vector<16x1xf32>
    %93 = arith.divf %91, %92 : vector<16x1xf32>
    %94 = vector.broadcast %93 : vector<16x1xf32> to vector<16x32xf32>
    %95 = arith.subf %89, %94 : vector<16x32xf32>
    %96 = arith.mulf %95, %95 : vector<16x32xf32>
    %cst_54 = arith.constant dense<0.000000e+00> : vector<16xf32>
    %97 = vector.multi_reduction <add>, %96, %cst_54 [1] : vector<16x32xf32> to vector<16xf32>
    %98 = vector.shape_cast %97 : vector<16xf32> to vector<16x1xf32>
    %cst_55 = arith.constant 3.200000e+01 : f32
    %99 = vector.broadcast %cst_55 : f32 to vector<16x1xf32>
    %100 = arith.divf %98, %99 : vector<16x1xf32>
    %101 = vector.broadcast %93 : vector<16x1xf32> to vector<16x32xf32>
    %102 = arith.subf %89, %101 : vector<16x32xf32>
    %cst_56 = arith.constant 9.99999996E-13 : f32
    %103 = vector.broadcast %cst_56 : f32 to vector<16x1xf32>
    %104 = arith.addf %100, %103 : vector<16x1xf32>
    %105 = math.rsqrt %104 : vector<16x1xf32>
    %106 = vector.broadcast %105 : vector<16x1xf32> to vector<16x32xf32>
    %107 = arith.mulf %102, %106 : vector<16x32xf32>
    %c0_57 = arith.constant 0 : index
    %c0_58 = arith.constant 0 : index
    %108 = vector.load %arg9[%c0_57, %c0_58] : memref<1x32xf32, #tpu.memory_space<vmem>>, vector<1x32xf32>
    %109 = vector.broadcast %108 : vector<1x32xf32> to vector<16x32xf32>
    %110 = arith.mulf %107, %109 : vector<16x32xf32>
    %c0_59 = arith.constant 0 : index
    %c0_60 = arith.constant 0 : index
    %111 = vector.load %arg10[%c0_59, %c0_60] : memref<1x32xf32, #tpu.memory_space<vmem>>, vector<1x32xf32>
    %112 = vector.broadcast %111 : vector<1x32xf32> to vector<16x32xf32>
    %113 = arith.addf %110, %112 : vector<16x32xf32>
    %c0_61 = arith.constant 0 : index
    %c0_62 = arith.constant 0 : index
    %c0_63 = arith.constant 0 : index
    %114 = vector.load %arg11[%c0_61, %c0_62, %c0_63] : memref<1x16x32xf32, #tpu.memory_space<vmem>>, vector<1x16x32xf32>
    %115 = vector.shape_cast %114 : vector<1x16x32xf32> to vector<16x32xf32>
    %116 = vector.shape_cast %113 : vector<16x32xf32> to vector<1x16x32xf32>
    tpu.vector_store %arg11[%c0_61, %c0_62, %c0_63], %116 {strides = array<i32>} : memref<1x16x32xf32, #tpu.memory_space<vmem>>, vector<1x16x32xf32>,
    return
  }
  func.func @transform_0(%arg0: i32, %arg1: i32) -> (i32, i32, i32) {
    %c0_i32 = arith.constant 0 : i32
    %c0_i32_0 = arith.constant 0 : i32
    return %arg0, %arg1, %c0_i32 : i32, i32, i32
  }
  func.func @transform_1(%arg0: i32, %arg1: i32) -> (i32, i32, i32) {
    %c0_i32 = arith.constant 0 : i32
    %c0_i32_0 = arith.constant 0 : i32
    %c0_i32_1 = arith.constant 0 : i32
    return %arg0, %c0_i32, %c0_i32_0 : i32, i32, i32
  }
  func.func @transform_2(%arg0: i32, %arg1: i32) -> (i32, i32, i32, i32) {
    %c0_i32 = arith.constant 0 : i32
    %c0_i32_0 = arith.constant 0 : i32
    %c0_i32_1 = arith.constant 0 : i32
    return %arg0, %c0_i32, %arg1, %c0_i32_0 : i32, i32, i32, i32
  }
  func.func @transform_3(%arg0: i32, %arg1: i32) -> (i32, i32) {
    %c0_i32 = arith.constant 0 : i32
    %c0_i32_0 = arith.constant 0 : i32
    %c0_i32_1 = arith.constant 0 : i32
    return %c0_i32, %c0_i32_0 : i32, i32
  }
  func.func @transform_4(%arg0: i32, %arg1: i32) -> (i32, i32) {
    %c0_i32 = arith.constant 0 : i32
    %c0_i32_0 = arith.constant 0 : i32
    %c0_i32_1 = arith.constant 0 : i32
    return %c0_i32, %c0_i32_0 : i32, i32
  }
  func.func @transform_5(%arg0: i32, %arg1: i32) -> (i32, i32) {
    %c0_i32 = arith.constant 0 : i32
    %c0_i32_0 = arith.constant 0 : i32
    %c0_i32_1 = arith.constant 0 : i32
    return %c0_i32, %c0_i32_0 : i32, i32
  }
  func.func @transform_6(%arg0: i32, %arg1: i32) -> (i32, i32) {
    %c0_i32 = arith.constant 0 : i32
    %c0_i32_0 = arith.constant 0 : i32
    %c0_i32_1 = arith.constant 0 : i32
    return %c0_i32, %c0_i32_0 : i32, i32
  }
  func.func @transform_7(%arg0: i32, %arg1: i32) -> (i32, i32) {
    %c0_i32 = arith.constant 0 : i32
    %c0_i32_0 = arith.constant 0 : i32
    %c0_i32_1 = arith.constant 0 : i32
    return %c0_i32, %c0_i32_0 : i32, i32
  }
  func.func @transform_8(%arg0: i32, %arg1: i32) -> (i32, i32) {
    %c0_i32 = arith.constant 0 : i32
    %c0_i32_0 = arith.constant 0 : i32
    %c0_i32_1 = arith.constant 0 : i32
    return %c0_i32, %c0_i32_0 : i32, i32
  }
  func.func @transform_9(%arg0: i32, %arg1: i32) -> (i32, i32, i32) {
    %c0_i32 = arith.constant 0 : i32
    %c0_i32_0 = arith.constant 0 : i32
    return %arg0, %arg1, %c0_i32 : i32, i32, i32
  }
}

</mosaic_0001>

<llo_original>
// kernel: tpu_custom_call.1
$region0: #{tpu_custom_call.1}
  #allocation0 [shape = 'u32[]', space=smem, size = 0x4, offset = 0x4, fixed_abs, tag = 'smem constant byte address 0x4 - core index']
  #allocation1 [shape = 'u32[144,128]{1,0:T(1,128)}', space=vmem, size = 0x12000, scoped, tag = 'internal scratch']
  #allocation2 [shape = 'f32[16,32]{1,0:T(8,128)}', space=vmem, size = 0x2000, scoped, tag = 'scratch operand']
  %s0 = inlined_call_operand.hbm [shape: f32[2,16,32], index: 0, kind: input, shape index: {}]
  %s1 = inlined_call_operand.hbm [shape: f32[2,16,32], index: 1, kind: input, shape index: {}]
  %s2 = inlined_call_operand.hbm [shape: f32[2,4,16,16], index: 2, kind: input, shape index: {}]
  %s3 = inlined_call_operand.hbm [shape: f32[32,32], index: 3, kind: input, shape index: {}]
  %s4 = inlined_call_operand.hbm [shape: f32[32,32], index: 4, kind: input, shape index: {}]
  %s5 = inlined_call_operand.hbm [shape: f32[32,32], index: 5, kind: input, shape index: {}]
  %s6 = inlined_call_operand.hbm [shape: f32[32,32], index: 6, kind: input, shape index: {}]
  %s7 = inlined_call_operand.vmem [shape: f32[1,32], index: 7, kind: input, shape index: {}]
  %s8 = inlined_call_operand.vmem [shape: f32[1,32], index: 8, kind: input, shape index: {}]
  %s9 = inlined_call_operand.hbm [shape: f32[2,16,32], index: 9, kind: output, shape index: {}]
  %s10 = sld [smem:[#allocation0]]
  $region97: #{tpu_custom_call.1} parent=0
    _
  %s12 = ssub.s32 1, %s10
  %s13 = scalar_select 0, %s12, %s10
  $region1: #{tpu_custom_call.1} parent=0
    #allocation3 [shape = 'u8[16384]{0}', space=vmem, size = 0x4000, scoped, tag = 'input window, operand 0']
    #allocation4 [shape = 's32[2]{0}', space=sflag, size = 0x8, scoped, tag = 'scoped memory for tpu_custom_call.1']
    #allocation5 [shape = 's32[2]{0}', space=sflag, size = 0x8, scoped, tag = 'scoped memory for tpu_custom_call.1']
    #allocation6 [shape = 'u8[16384]{0}', space=vmem, size = 0x4000, scoped, tag = 'input window, operand 1']
    #allocation7 [shape = 's32[2]{0}', space=sflag, size = 0x8, scoped, tag = 'scoped memory for tpu_custom_call.1']
    #allocation8 [shape = 'u8[65536]{0}', space=vmem, size = 0x10000, scoped, tag = 'input window, operand 2']
    #allocation9 [shape = 'u8[16384]{0}', space=vmem, size = 0x4000, scoped, tag = 'input window, operand 3, single buffered']
    #allocation10 [shape = 's32[1]{0}', space=sflag, size = 0x4, scoped, tag = 'scoped memory for tpu_custom_call.1']
    #allocation11 [shape = 'u8[16384]{0}', space=vmem, size = 0x4000, scoped, tag = 'input window, operand 4, single buffered']
    #allocation12 [shape = 'u8[16384]{0}', space=vmem, size = 0x4000, scoped, tag = 'input window, operand 5, single buffered']
    #allocation13 [shape = 's32[1]{0}', space=sflag, size = 0x4, scoped, tag = 'scoped memory for tpu_custom_call.1']
    #allocation14 [shape = 'u8[16384]{0}', space=vmem, size = 0x4000, scoped, tag = 'input window, operand 6, single buffered']
    #allocation15 [shape = 'u8[16384]{0}', space=vmem, size = 0x4000, scoped, tag = 'output window, operand 0']
    %14 = vsyncpa [#allocation4], 0
    %s15 = scalar_lea.sflag [#allocation4], 1
    %16 = vsyncpa %s15, 0
    %17 = vsyncpa [#allocation7], 0
    %s18 = scalar_lea.sflag [#allocation7], 1
    %19 = vsyncpa %s18, 0
    %20 = vsyncpa [#allocation10], 0
    %21 = vsyncpa [#allocation13], 0
    %22 = vsyncpa [#allocation5], 0
    %s23 = scalar_lea.sflag [#allocation5], 1
    %24 = vsyncpa %s23, 0
    loop: start=0, step=1, limit=4
    $region2: #{tpu_custom_call.1} parent=1 // loop_pre_header
      _
    $region3: #{tpu_custom_call.1} parent=1 // loop_header
      %s26 = sphi 0, %s30
      %p27 = scmp.ge.s32.totalorder %s26, 4
      %s33 = sphi 0, %s45
      %s34 = sphi 0, %s41
      %s35 = sphi 0, %s33
      %s36 = sphi 0, %s34
      %s37 = sphi 0, %s35
      %s38 = sphi 0, %s36
      %s50 = sphi 0, %s52
      %s53 = sphi 0, %s50
      %s54 = sphi 0, %s53
      %s70 = sphi 0, %s54
      %s76 = sphi 0, %s78
      %s79 = sphi 0, %s76
      %s80 = sphi 0, %s79
      %s96 = sphi 0, %s80
      %s104 = sphi 0, %s106
      %s107 = sphi 0, %s104
      %s108 = sphi 0, %s107
      %s124 = sphi 0, %s108
      %s128 = sphi 0, %s128
      %s130 = sphi 0, %s128
      %s131 = sphi 0, %s130
      %s145 = sphi 0, %s131
      %s149 = sphi 0, %s149
      %s151 = sphi 0, %s149
      %s152 = sphi 0, %s151
      %s166 = sphi 0, %s152
      %s170 = sphi 0, %s170
      %s172 = sphi 0, %s170
      %s173 = sphi 0, %s172
      %s187 = sphi 0, %s173
      %s191 = sphi 0, %s191
      %s193 = sphi 0, %s191
      %s194 = sphi 0, %s193
      %s208 = sphi 0, %s194
      %s212 = sphi 0, %s212
      %s214 = sphi 0, %s212
      %s215 = sphi 0, %s214
      %s229 = sphi 0, %s215
      %s233 = sphi 0, %s233
      %s235 = sphi 0, %s233
      %s236 = sphi 0, %s235
      %s250 = sphi 0, %s236
      %s258 = sphi 0, %s260
      %s261 = sphi 0, %s258
      %s262 = sphi 0, %s261
      %s278 = sphi 0, %s262
    $region4: #{tpu_custom_call.1} parent=1 // loop_header_branch
      %29 = sbr.rel (%p27) target = $region8
    $region5: #{tpu_custom_call.1} parent=1 // loop_body
      %s31 = ssub.s32 %s26, 1
      %s32 = ssub.s32 %s26, 2
      %s39 = sadd.s32 1, %s34
      %p40 = scmp.ge.s32.totalorder %s39, 1
      %s41 = scalar_select %p40, 0, %s39
      %s42 = sadd.s32 1, %s33
      %s43 = scalar_select %p40, %s42, %s33
      %p44 = scmp.ge.s32.totalorder %s43, 2
      %s45 = scalar_select %p44, 0, %s43
      %s46 = ssub.s32 %s33, %s45
      %s47 = ssub.s32 %s34, %s41
      %s48 = sor.u32 %s46, %s47
      %p49 = scmp.eq.s32.totalorder %s48, 0
      %s51 = sadd.s32 %s50, 1
      %s52 = scalar_select %p49, %s50, %s51
      %p55 = pneg %p49
      %p56 = scmp.eq.s32.totalorder %s26, 1
      %p57 = por %p55, %p56
      %p58 = scmp.ne.s32.totalorder %s50, %s53
      %p59 = scmp.eq.s32.totalorder %s26, 0
      %p60 = por %p58, %p59
      %p61 = scmp.ne.s32.totalorder %s50, %s53
      %p62 = scmp.eq.s32.totalorder %s31, 1
      %p63 = por %p61, %p62
      %p64 = scmp.ne.s32.totalorder %s53, %s54
      %p65 = scmp.eq.s32.totalorder %s31, 0
      %p66 = por %p64, %p65
      %p67 = scmp.ne.s32.totalorder %s53, %s54
      %p68 = scmp.eq.s32.totalorder %s32, 1
      %p69 = por %p67, %p68
      %p71 = scmp.ne.s32.totalorder %s54, %s70
      %p72 = scmp.eq.s32.totalorder %s32, 0
      %p73 = por %p71, %p72
      %s74 = ssub.s32 %s33, %s45
      %p75 = scmp.eq.s32.totalorder %s74, 0
      %s77 = sadd.s32 %s76, 1
      %s78 = scalar_select %p75, %s76, %s77
      %p81 = pneg %p75
      %p82 = scmp.eq.s32.totalorder %s26, 1
      %p83 = por %p81, %p82
      %p84 = scmp.ne.s32.totalorder %s76, %s79
      %p85 = scmp.eq.s32.totalorder %s26, 0
      %p86 = por %p84, %p85
      %p87 = scmp.ne.s32.totalorder %s76, %s79
      %p88 = scmp.eq.s32.totalorder %s31, 1
      %p89 = por %p87, %p88
      %p90 = scmp.ne.s32.totalorder %s79, %s80
      %p91 = scmp.eq.s32.totalorder %s31, 0
      %p92 = por %p90, %p91
      %p93 = scmp.ne.s32.totalorder %s79, %s80
      %p94 = scmp.eq.s32.totalorder %s32, 1
      %p95 = por %p93, %p94
      %p97 = scmp.ne.s32.totalorder %s80, %s96
      %p98 = scmp.eq.s32.totalorder %s32, 0
      %p99 = por %p97, %p98
      %s100 = ssub.s32 %s33, %s45
      %s101 = ssub.s32 %s34, %s41
      %s102 = sor.u32 %s100, %s101
      %p103 = scmp.eq.s32.totalorder %s102, 0
      %s105 = sadd.s32 %s104, 1
      %s106 = scalar_select %p103, %s104, %s105
      %p109 = pneg %p103
      %p110 = scmp.eq.s32.totalorder %s26, 1
      %p111 = por %p109, %p110
      %p112 = scmp.ne.s32.totalorder %s104, %s107
      %p113 = scmp.eq.s32.totalorder %s26, 0
      %p114 = por %p112, %p113
      %p115 = scmp.ne.s32.totalorder %s104, %s107
      %p116 = scmp.eq.s32.totalorder %s31, 1
      %p117 = por %p115, %p116
      %p118 = scmp.ne.s32.totalorder %s107, %s108
      %p119 = scmp.eq.s32.totalorder %s31, 0
      %p120 = por %p118, %p119
      %p121 = scmp.ne.s32.totalorder %s107, %s108
      %p122 = scmp.eq.s32.totalorder %s32, 1
      %p123 = por %p121, %p122
      %p125 = scmp.ne.s32.totalorder %s108, %s124
      %p126 = scmp.eq.s32.totalorder %s32, 0
      %p127 = por %p125, %p126
      %s129 = sadd.s32 %s128, 1
      %p132 = scmp.eq.s32.totalorder %s26, 1
      %p133 = scmp.ne.s32.totalorder %s128, %s130
      %p134 = scmp.eq.s32.totalorder %s26, 0
      %p135 = por %p133, %p134
      %p136 = scmp.ne.s32.totalorder %s128, %s130
      %p137 = scmp.eq.s32.totalorder %s31, 1
      %p138 = por %p136, %p137
      %p139 = scmp.ne.s32.totalorder %s130, %s131
      %p140 = scmp.eq.s32.totalorder %s31, 0
      %p141 = por %p139, %p140
      %p142 = scmp.ne.s32.totalorder %s130, %s131
      %p143 = scmp.eq.s32.totalorder %s32, 1
      %p144 = por %p142, %p143
      %p146 = scmp.ne.s32.totalorder %s131, %s145
      %p147 = scmp.eq.s32.totalorder %s32, 0
      %p148 = por %p146, %p147
      %s150 = sadd.s32 %s149, 1
      %p153 = scmp.eq.s32.totalorder %s26, 1
      %p154 = scmp.ne.s32.totalorder %s149, %s151
      %p155 = scmp.eq.s32.totalorder %s26, 0
      %p156 = por %p154, %p155
      %p157 = scmp.ne.s32.totalorder %s149, %s151
      %p158 = scmp.eq.s32.totalorder %s31, 1
      %p159 = por %p157, %p158
      %p160 = scmp.ne.s32.totalorder %s151, %s152
      %p161 = scmp.eq.s32.totalorder %s31, 0
      %p162 = por %p160, %p161
      %p163 = scmp.ne.s32.totalorder %s151, %s152
      %p164 = scmp.eq.s32.totalorder %s32, 1
      %p165 = por %p163, %p164
      %p167 = scmp.ne.s32.totalorder %s152, %s166
      %p168 = scmp.eq.s32.totalorder %s32, 0
      %p169 = por %p167, %p168
      %s171 = sadd.s32 %s170, 1
      %p174 = scmp.eq.s32.totalorder %s26, 1
      %p175 = scmp.ne.s32.totalorder %s170, %s172
      %p176 = scmp.eq.s32.totalorder %s26, 0
      %p177 = por %p175, %p176
      %p178 = scmp.ne.s32.totalorder %s170, %s172
      %p179 = scmp.eq.s32.totalorder %s31, 1
      %p180 = por %p178, %p179
      %p181 = scmp.ne.s32.totalorder %s172, %s173
      %p182 = scmp.eq.s32.totalorder %s31, 0
      %p183 = por %p181, %p182
      %p184 = scmp.ne.s32.totalorder %s172, %s173
      %p185 = scmp.eq.s32.totalorder %s32, 1
      %p186 = por %p184, %p185
      %p188 = scmp.ne.s32.totalorder %s173, %s187
      %p189 = scmp.eq.s32.totalorder %s32, 0
      %p190 = por %p188, %p189
      %s192 = sadd.s32 %s191, 1
      %p195 = scmp.eq.s32.totalorder %s26, 1
      %p196 = scmp.ne.s32.totalorder %s191, %s193
      %p197 = scmp.eq.s32.totalorder %s26, 0
      %p198 = por %p196, %p197
      %p199 = scmp.ne.s32.totalorder %s191, %s193
      %p200 = scmp.eq.s32.totalorder %s31, 1
      %p201 = por %p199, %p200
      %p202 = scmp.ne.s32.totalorder %s193, %s194
      %p203 = scmp.eq.s32.totalorder %s31, 0
      %p204 = por %p202, %p203
      %p205 = scmp.ne.s32.totalorder %s193, %s194
      %p206 = scmp.eq.s32.totalorder %s32, 1
      %p207 = por %p205, %p206
      %p209 = scmp.ne.s32.totalorder %s194, %s208
      %p210 = scmp.eq.s32.totalorder %s32, 0
      %p211 = por %p209, %p210
      %s213 = sadd.s32 %s212, 1
      %p216 = scmp.eq.s32.totalorder %s26, 1
      %p217 = scmp.ne.s32.totalorder %s212, %s214
      %p218 = scmp.eq.s32.totalorder %s26, 0
      %p219 = por %p217, %p218
      %p220 = scmp.ne.s32.totalorder %s212, %s214
      %p221 = scmp.eq.s32.totalorder %s31, 1
      %p222 = por %p220, %p221
      %p223 = scmp.ne.s32.totalorder %s214, %s215
      %p224 = scmp.eq.s32.totalorder %s31, 0
      %p225 = por %p223, %p224
      %p226 = scmp.ne.s32.totalorder %s214, %s215
      %p227 = scmp.eq.s32.totalorder %s32, 1
      %p228 = por %p226, %p227
      %p230 = scmp.ne.s32.totalorder %s215, %s229
      %p231 = scmp.eq.s32.totalorder %s32, 0
      %p232 = por %p230, %p231
      %s234 = sadd.s32 %s233, 1
      %p237 = scmp.eq.s32.totalorder %s26, 1
      %p238 = scmp.ne.s32.totalorder %s233, %s235
      %p239 = scmp.eq.s32.totalorder %s26, 0
      %p240 = por %p238, %p239
      %p241 = scmp.ne.s32.totalorder %s233, %s235
      %p242 = scmp.eq.s32.totalorder %s31, 1
      %p243 = por %p241, %p242
      %p244 = scmp.ne.s32.totalorder %s235, %s236
      %p245 = scmp.eq.s32.totalorder %s31, 0
      %p246 = por %p244, %p245
      %p247 = scmp.ne.s32.totalorder %s235, %s236
      %p248 = scmp.eq.s32.totalorder %s32, 1
      %p249 = por %p247, %p248
      %p251 = scmp.ne.s32.totalorder %s236, %s250
      %p252 = scmp.eq.s32.totalorder %s32, 0
      %p253 = por %p251, %p252
      %s254 = ssub.s32 %s33, %s45
      %s255 = ssub.s32 %s34, %s41
      %s256 = sor.u32 %s254, %s255
      %p257 = scmp.eq.s32.totalorder %s256, 0
      %s259 = sadd.s32 %s258, 1
      %s260 = scalar_select %p257, %s258, %s259
      %p263 = pneg %p257
      %p264 = scmp.eq.s32.totalorder %s26, 1
      %p265 = por %p263, %p264
      %p266 = scmp.ne.s32.totalorder %s258, %s261
      %p267 = scmp.eq.s32.totalorder %s26, 0
      %p268 = por %p266, %p267
      %p269 = scmp.ne.s32.totalorder %s258, %s261
      %p270 = scmp.eq.s32.totalorder %s31, 1
      %p271 = por %p269, %p270
      %p272 = scmp.ne.s32.totalorder %s261, %s262
      %p273 = scmp.eq.s32.totalorder %s31, 0
      %p274 = por %p272, %p273
      %p275 = scmp.ne.s32.totalorder %s261, %s262
      %p276 = scmp.eq.s32.totalorder %s32, 1
      %p277 = por %p275, %p276
      %p279 = scmp.ne.s32.totalorder %s262, %s278
      %p280 = scmp.eq.s32.totalorder %s32, 0
      %p281 = por %p279, %p280
      %p282 = scmp.le.s32.totalorder 1, %s26
      %p283 = scmp.lt.s32.totalorder %s26, 3
      %p284 = pnand %p282, %p283
      %p285 = pneg %p284
      // Predicated region
      $region9: #{tpu_custom_call.1} parent=5 // pred_check
        _
      $region10: #{tpu_custom_call.1} parent=5 // pred_check_branch
        %287 = sbr.rel (%p284) target = $region12
      $region11: #{tpu_custom_call.1} parent=5 // pred_region
        %s288 = ssub.s32 %s26, 1
        // Predicated region
        $region13: #{tpu_custom_call.1} parent=11 // pred_check
          %p289 = pneg %p141
        $region14: #{tpu_custom_call.1} parent=11 // pred_check_branch
          %291 = sbr.rel (%p289) target = $region16
        $region15: #{tpu_custom_call.1} parent=11 // pred_region
          %s293 = ssub.s32 512, 512
          %294 = vsyncadd [#allocation10], %s293
          %s295 = sshll.u32 [#allocation9], 4
          %s296 = int_to_ptr.vmem [resolvable:$true] %s295
          %301 = dma.hbm_to_vmem [thread:$0]  %s3, 512, %s296, [#allocation10], 128, 128, 8
        $region16: #{tpu_custom_call.1} parent=11 // pred_fallthru
          _
        // Predicated region
        $region17: #{tpu_custom_call.1} parent=11 // pred_check
          %p302 = pneg %p162
        $region18: #{tpu_custom_call.1} parent=11 // pred_check_branch
          %304 = sbr.rel (%p302) target = $region20
        $region19: #{tpu_custom_call.1} parent=11 // pred_region
          %s306 = ssub.s32 512, 512
          %307 = vsyncadd [#allocation10], %s306
          %s308 = sshll.u32 [#allocation11], 4
          %s309 = int_to_ptr.vmem [resolvable:$true] %s308
          %314 = dma.hbm_to_vmem [thread:$0]  %s4, 512, %s309, [#allocation10], 128, 128, 8
        $region20: #{tpu_custom_call.1} parent=11 // pred_fallthru
          _
        // Predicated region
        $region21: #{tpu_custom_call.1} parent=11 // pred_check
          %p315 = pneg %p183
        $region22: #{tpu_custom_call.1} parent=11 // pred_check_branch
          %317 = sbr.rel (%p315) target = $region24
        $region23: #{tpu_custom_call.1} parent=11 // pred_region
          %s319 = ssub.s32 512, 512
          %320 = vsyncadd [#allocation13], %s319
          %s321 = sshll.u32 [#allocation12], 4
          %s322 = int_to_ptr.vmem [resolvable:$true] %s321
          %327 = dma.hbm_to_vmem [thread:$0]  %s5, 512, %s322, [#allocation13], 128, 128, 8
        $region24: #{tpu_custom_call.1} parent=11 // pred_fallthru
          _
        // Predicated region
        $region25: #{tpu_custom_call.1} parent=11 // pred_check
          %p328 = pneg %p204
        $region26: #{tpu_custom_call.1} parent=11 // pred_check_branch
          %330 = sbr.rel (%p328) target = $region28
        $region27: #{tpu_custom_call.1} parent=11 // pred_region
          %s332 = ssub.s32 512, 512
          %333 = vsyncadd [#allocation13], %s332
          %s334 = sshll.u32 [#allocation14], 4
          %s335 = int_to_ptr.vmem [resolvable:$true] %s334
          %340 = dma.hbm_to_vmem [thread:$0]  %s6, 512, %s335, [#allocation13], 128, 128, 8
        $region28: #{tpu_custom_call.1} parent=11 // pred_fallthru
          _
        // Predicated region
        $region29: #{tpu_custom_call.1} parent=11 // pred_check
          %p341 = pneg %p225
        $region30: #{tpu_custom_call.1} parent=11 // pred_check_branch
          %343 = sbr.rel (%p341) target = $region32
        $region31: #{tpu_custom_call.1} parent=11 // pred_region
          _
        $region32: #{tpu_custom_call.1} parent=11 // pred_fallthru
          _
        // Predicated region
        $region33: #{tpu_custom_call.1} parent=11 // pred_check
          %p344 = pneg %p246
        $region34: #{tpu_custom_call.1} parent=11 // pred_check_branch
          %346 = sbr.rel (%p344) target = $region36
        $region35: #{tpu_custom_call.1} parent=11 // pred_region
          _
        $region36: #{tpu_custom_call.1} parent=11 // pred_fallthru
          _
      $region12: #{tpu_custom_call.1} parent=5 // pred_fallthru
        _
      %p347 = scmp.lt.s32.totalorder %s26, 2
      // Predicated region
      $region37: #{tpu_custom_call.1} parent=5 // pred_check
        %p348 = pneg %p347
      $region38: #{tpu_custom_call.1} parent=5 // pred_check_branch
        %350 = sbr.rel (%p348) target = $region40
      $region39: #{tpu_custom_call.1} parent=5 // pred_region
        // Predicated region
        $region41: #{tpu_custom_call.1} parent=39 // pred_check
          %p351 = pneg %p60
        $region42: #{tpu_custom_call.1} parent=39 // pred_check_branch
          %353 = sbr.rel (%p351) target = $region44
        $region43: #{tpu_custom_call.1} parent=39 // pred_region
          %s354 = sand.u32 %s50, 1
          %s355 = scalar_lea.sflag [#allocation4], %s354
          %s356 = sand.u32 %s50, 1
          %s357 = smul.addr %s356, 16
          %s358 = scalar_lea.vmem [#allocation3], %s357
          %s359 = smul.u32 2, %s34
          %s361 = ssub.s32 256, 256
          %362 = vsyncadd %s355, %s361
          %s363 = smul.addr %s33, 2
          %s364 = sadd.s32 %s359, %s363
          %s365 = smul.addr %s364, 128
          %s366 = scalar_lea.hbm %s0, %s365
          %s367 = sshll.u32 %s358, 4
          %s368 = int_to_ptr.vmem [resolvable:$true] %s367
          %373 = dma.hbm_to_vmem [thread:$0]  %s366, 256, %s368, %s355, 128, 128, 8
        $region44: #{tpu_custom_call.1} parent=39 // pred_fallthru
          _
        // Predicated region
        $region45: #{tpu_custom_call.1} parent=39 // pred_check
          %p374 = pneg %p86
        $region46: #{tpu_custom_call.1} parent=39 // pred_check_branch
          %376 = sbr.rel (%p374) target = $region48
        $region47: #{tpu_custom_call.1} parent=39 // pred_region
          %s377 = sand.u32 %s26, 1
          %s378 = scalar_lea.sflag [#allocation7], %s377
          %s379 = sand.u32 %s76, 1
          %s380 = smul.addr %s379, 16
          %s381 = scalar_lea.vmem [#allocation6], %s380
          %s383 = ssub.s32 256, 256
          %384 = vsyncadd %s378, %s383
          %s385 = smul.addr %s33, 2
          %s386 = smul.addr %s385, 128
          %s387 = scalar_lea.hbm %s1, %s386
          %s388 = sshll.u32 %s381, 4
          %s389 = int_to_ptr.vmem [resolvable:$true] %s388
          %394 = dma.hbm_to_vmem [thread:$0]  %s387, 256, %s389, %s378, 128, 128, 8
        $region48: #{tpu_custom_call.1} parent=39 // pred_fallthru
          _
        // Predicated region
        $region49: #{tpu_custom_call.1} parent=39 // pred_check
          %p395 = pneg %p114
        $region50: #{tpu_custom_call.1} parent=39 // pred_check_branch
          %397 = sbr.rel (%p395) target = $region52
        $region51: #{tpu_custom_call.1} parent=39 // pred_region
          %s398 = sand.u32 %s26, 1
          %s399 = scalar_lea.sflag [#allocation7], %s398
          %s400 = sand.u32 %s104, 1
          %s401 = smul.addr %s400, 64
          %s402 = scalar_lea.vmem [#allocation8], %s401
          %s403 = smul.u32 2, %s34
          %s405 = ssub.s32 1024, 1024
          %406 = vsyncadd %s399, %s405
          %s407 = smul.addr %s33, 8
          %s408 = sadd.s32 %s403, %s407
          %s409 = smul.addr %s408, 128
          %s410 = scalar_lea.hbm %s2, %s409
          %s411 = sshll.u32 %s402, 4
          %s412 = int_to_ptr.vmem [resolvable:$true] %s411
          %417 = dma.hbm_to_vmem [thread:$0]  %s410, 1024, %s412, %s399, 128, 128, 8
        $region52: #{tpu_custom_call.1} parent=39 // pred_fallthru
          _
      $region40: #{tpu_custom_call.1} parent=5 // pred_fallthru
        _
      %p418 = scmp.le.s32.totalorder 1, %s26
      %p419 = scmp.lt.s32.totalorder %s26, 3
      %p420 = pnand %p418, %p419
      %p421 = pneg %p420
      // Predicated region
      $region53: #{tpu_custom_call.1} parent=5 // pred_check
        _
      $region54: #{tpu_custom_call.1} parent=5 // pred_check_branch
        %423 = sbr.rel (%p420) target = $region56
      $region55: #{tpu_custom_call.1} parent=5 // pred_region
        %s424 = ssub.s32 %s26, 1
        %s425 = sand.u32 %s53, 1
        %s426 = scalar_lea.sflag [#allocation4], %s425
        %s427 = sand.u32 %s53, 1
        %s428 = smul.addr %s427, 16
        %s429 = scalar_lea.vmem [#allocation3], %s428
        // Predicated region
        $region57: #{tpu_custom_call.1} parent=55 // pred_check
          %p430 = pneg %p66
        $region58: #{tpu_custom_call.1} parent=55 // pred_check_branch
          %432 = sbr.rel (%p430) target = $region60
        $region59: #{tpu_custom_call.1} parent=55 // pred_region
          %433 = dma.done %s426, 256
        $region60: #{tpu_custom_call.1} parent=55 // pred_fallthru
          _
        %s434 = sand.u32 %s31, 1
        %s435 = scalar_lea.sflag [#allocation7], %s434
        %s436 = sand.u32 %s79, 1
        %s437 = smul.addr %s436, 16
        %s438 = scalar_lea.vmem [#allocation6], %s437
        // Predicated region
        $region61: #{tpu_custom_call.1} parent=55 // pred_check
          %p439 = pneg %p92
        $region62: #{tpu_custom_call.1} parent=55 // pred_check_branch
          %441 = sbr.rel (%p439) target = $region64
        $region63: #{tpu_custom_call.1} parent=55 // pred_region
          %442 = dma.done %s435, 256
        $region64: #{tpu_custom_call.1} parent=55 // pred_fallthru
          _
        %s443 = sand.u32 %s31, 1
        %s444 = scalar_lea.sflag [#allocation7], %s443
        %s445 = sand.u32 %s107, 1
        %s446 = smul.addr %s445, 64
        %s447 = scalar_lea.vmem [#allocation8], %s446
        // Predicated region
        $region65: #{tpu_custom_call.1} parent=55 // pred_check
          %p448 = pneg %p120
        $region66: #{tpu_custom_call.1} parent=55 // pred_check_branch
          %450 = sbr.rel (%p448) target = $region68
        $region67: #{tpu_custom_call.1} parent=55 // pred_region
          %451 = dma.done %s444, 1024
        $region68: #{tpu_custom_call.1} parent=55 // pred_fallthru
          _
        // Predicated region
        $region69: #{tpu_custom_call.1} parent=55 // pred_check
          %p452 = pneg %p141
        $region70: #{tpu_custom_call.1} parent=55 // pred_check_branch
          %454 = sbr.rel (%p452) target = $region72
        $region71: #{tpu_custom_call.1} parent=55 // pred_region
          %455 = dma.done [#allocation10], 512
        $region72: #{tpu_custom_call.1} parent=55 // pred_fallthru
          _
        // Predicated region
        $region73: #{tpu_custom_call.1} parent=55 // pred_check
          %p456 = pneg %p162
        $region74: #{tpu_custom_call.1} parent=55 // pred_check_branch
          %458 = sbr.rel (%p456) target = $region76
        $region75: #{tpu_custom_call.1} parent=55 // pred_region
          %459 = dma.done [#allocation10], 512
        $region76: #{tpu_custom_call.1} parent=55 // pred_fallthru
          _
        // Predicated region
        $region77: #{tpu_custom_call.1} parent=55 // pred_check
          %p460 = pneg %p183
        $region78: #{tpu_custom_call.1} parent=55 // pred_check_branch
          %462 = sbr.rel (%p460) target = $region80
        $region79: #{tpu_custom_call.1} parent=55 // pred_region
          %463 = dma.done [#allocation13], 512
        $region80: #{tpu_custom_call.1} parent=55 // pred_fallthru
          _
        // Predicated region
        $region81: #{tpu_custom_call.1} parent=55 // pred_check
          %p464 = pneg %p204
        $region82: #{tpu_custom_call.1} parent=55 // pred_check_branch
          %466 = sbr.rel (%p464) target = $region84
        $region83: #{tpu_custom_call.1} parent=55 // pred_region
          %467 = dma.done [#allocation13], 512
        $region84: #{tpu_custom_call.1} parent=55 // pred_fallthru
          _
        %s468 = sand.u32 %s53, 1
        %s469 = scalar_lea.sflag [#allocation4], %s468
        %s470 = sand.u32 %s53, 1
        %s471 = smul.addr %s470, 16
        %s472 = scalar_lea.vmem [#allocation3], %s471
        %p473 = pneg %p66
        %p474 = pneg %p63
        %s475 = sand.u32 %s31, 1
        %s476 = scalar_lea.sflag [#allocation7], %s475
        %s477 = sand.u32 %s79, 1
        %s478 = smul.addr %s477, 16
        %s479 = scalar_lea.vmem [#allocation6], %s478
        %p480 = pneg %p92
        %p481 = pneg %p89
        %s482 = sand.u32 %s31, 1
        %s483 = scalar_lea.sflag [#allocation7], %s482
        %s484 = sand.u32 %s107, 1
        %s485 = smul.addr %s484, 64
        %s486 = scalar_lea.vmem [#allocation8], %s485
        %p487 = pneg %p120
        %p488 = pneg %p117
        %p489 = pneg %p141
        %p490 = pneg %p138
        %p491 = pneg %p162
        %p492 = pneg %p159
        %p493 = pneg %p183
        %p494 = pneg %p180
        %p495 = pneg %p204
        %p496 = pneg %p201
        %p497 = pneg %p225
        %p498 = pneg %p222
        %p499 = pneg %p246
        %p500 = pneg %p243
        %p501 = pneg %p274
        %p502 = pneg %p271
        %s503 = sand.u32 %s261, 1
        %s504 = scalar_lea.sflag [#allocation5], %s503
        %s505 = sand.u32 %s261, 1
        %s506 = smul.addr %s505, 16
        %s507 = scalar_lea.vmem [#allocation15], %s506
        %s508 = smul.u32 2, %s36
        %s509 = smul.u32 2, %s36
        %s510 = smul.u32 2, %s36
        %v511 = vld [vmem:[%s429] sm:$0xff]
        %v512 = vld [vmem:[%s429 + $0x8] sm:$0xff]
        %v513 = vld [vmem:[%s438] sm:$0xff]
        %v514 = vld [vmem:[%s438 + $0x8] sm:$0xff]
        %v515 = vld [vmem:[#allocation9] sm:$0xff]
        %v516 = vld [vmem:[#allocation9 + $0x8] sm:$0xff]
        %v517 = vld [vmem:[#allocation9 + $0x10] sm:$0xff]
        %v518 = vld [vmem:[#allocation9 + $0x18] sm:$0xff]
        %vm519 = vcmask 261120
        %v521 = vsel %vm519, %v511, 0
        %v524 = vsel %vm519, %v512, 0
        %526 = vmatprep.subr.mxu0 0.0
        %527 = vmatpush1.msra.mxu0 %v515
        %528 = vmatprep.subr.mxu0 0.0
        %529 = vmatpush1.msra.mxu0 %v516
        %530 = vmatprep.subr.mxu0 0.0
        %531 = vmatpush1.msra.mxu0 %v517
        %532 = vmatprep.subr.mxu0 0.0
        %533 = vmatpush1.msra.mxu0 %v518
        %534 = vmatprep.subr.mxu0 0.0
        %535 = vmatpush1.msra.mxu0 0.0
        %536 = vmatprep.subr.mxu0 0.0
        %537 = vmatpush1.msra.mxu0 0.0
        %538 = vmatprep.subr.mxu0 0.0
        %539 = vmatpush1.msra.mxu0 0.0
        %540 = vmatprep.subr.mxu0 0.0
        %541 = vmatpush1.msra.mxu0 0.0
        %542 = vmatprep.subr.mxu0 0.0
        %543 = vmatpush1.msra.mxu0 0.0
        %544 = vmatprep.subr.mxu0 0.0
        %545 = vmatpush1.msra.mxu0 0.0
        %546 = vmatprep.subr.mxu0 0.0
        %547 = vmatpush1.msra.mxu0 0.0
        %548 = vmatprep.subr.mxu0 0.0
        %549 = vmatpush1.msra.mxu0 0.0
        %550 = vmatprep.subr.mxu0 0.0
        %551 = vmatpush1.msra.mxu0 0.0
        %552 = vmatprep.subr.mxu0 0.0
        %553 = vmatpush1.msra.mxu0 0.0
        %554 = vmatprep.subr.mxu0 0.0
        %555 = vmatpush1.msra.mxu0 0.0
        %556 = vmatprep.subr.mxu0 0.0
        %557 = vmatpush1.msra.mxu0 0.0
        %558 = vmatprep.subr.mxu0 0.0
        %559 = vmatpush1.msra.mxu0 0.0
        %560 = vmatprep.subr.mxu0 0.0
        %561 = vmatpush1.msra.mxu0 0.0
        %562 = vmatprep.subr.mxu0 0.0
        %563 = vmatpush1.msra.mxu0 0.0
        %564 = vmatprep.subr.mxu0 0.0
        %565 = vmatpush1.msra.mxu0 0.0
        %566 = vmatprep.subr.mxu0 0.0
        %567 = vmatpush1.msra.mxu0 0.0
        %568 = vmatprep.subr.mxu0 0.0
        %569 = vmatpush1.msra.mxu0 0.0
        %570 = vmatprep.subr.mxu0 0.0
        %571 = vmatpush1.msra.mxu0 0.0
        %572 = vmatprep.subr.mxu0 0.0
        %573 = vmatpush1.msra.mxu0 0.0
        %574 = vmatprep.subr.mxu0 0.0
        %575 = vmatpush1.msra.mxu0 0.0
        %576 = vmatprep.subr.mxu0 0.0
        %577 = vmatpush1.msra.mxu0 0.0
        %578 = vmatprep.subr.mxu0 0.0
        %579 = vmatpush1.msra.mxu0 0.0
        %580 = vmatprep.subr.mxu0 0.0
        %581 = vmatpush1.msra.mxu0 0.0
        %582 = vmatprep.subr.mxu0 0.0
        %583 = vmatpush1.msra.mxu0 0.0
        %584 = vmatprep.subr.mxu0 0.0
        %585 = vmatpush1.msra.mxu0 0.0
        %586 = vmatprep.subr.mxu0 0.0
        %587 = vmatpush1.msra.mxu0 0.0
        %588 = vmatprep.subr.mxu0 0.0
        %589 = vmatpush1.msra.mxu0 0.0
        %590 = vmatprep.mubr.f32.mxu0 0.0
        %591 = vmatmul.mubr.f32.gmra.mrb[0].mxu0 %v521
        %v592 = vpop.f32.mrb[0].mxu0
        %v593 = vadd.f32 0.0, %v592
        %v594 = vpop.f32.mrb[0].mxu0
        %595 = vmatprep.mubr.f32.mxu0 0.0
        %596 = vmatmul.mubr.f32.gmra.mrb[0].mxu0 %v524
        %v597 = vpop.f32.mrb[0].mxu0
        %v598 = vadd.f32 0.0, %v597
        %v599 = vpop.f32.mrb[0].mxu0
        %600 = vdwg.mxu0
        %v601 = vld [vmem:[#allocation11] sm:$0xff]
        %v602 = vld [vmem:[#allocation11 + $0x8] sm:$0xff]
        %v603 = vld [vmem:[#allocation11 + $0x10] sm:$0xff]
        %v604 = vld [vmem:[#allocation11 + $0x18] sm:$0xff]
        %v606 = vsel %vm519, %v513, 0
        %v609 = vsel %vm519, %v514, 0
        %611 = vmatprep.subr.mxu0 0.0
        %612 = vmatpush1.msra.mxu0 %v601
        %613 = vmatprep.subr.mxu0 0.0
        %614 = vmatpush1.msra.mxu0 %v602
        %615 = vmatprep.subr.mxu0 0.0
        %616 = vmatpush1.msra.mxu0 %v603
        %617 = vmatprep.subr.mxu0 0.0
        %618 = vmatpush1.msra.mxu0 %v604
        %619 = vmatprep.subr.mxu0 0.0
        %620 = vmatpush1.msra.mxu0 0.0
        %621 = vmatprep.subr.mxu0 0.0
        %622 = vmatpush1.msra.mxu0 0.0
        %623 = vmatprep.subr.mxu0 0.0
        %624 = vmatpush1.msra.mxu0 0.0
        %625 = vmatprep.subr.mxu0 0.0
        %626 = vmatpush1.msra.mxu0 0.0
        %627 = vmatprep.subr.mxu0 0.0
        %628 = vmatpush1.msra.mxu0 0.0
        %629 = vmatprep.subr.mxu0 0.0
        %630 = vmatpush1.msra.mxu0 0.0
        %631 = vmatprep.subr.mxu0 0.0
        %632 = vmatpush1.msra.mxu0 0.0
        %633 = vmatprep.subr.mxu0 0.0
        %634 = vmatpush1.msra.mxu0 0.0
        %635 = vmatprep.subr.mxu0 0.0
        %636 = vmatpush1.msra.mxu0 0.0
        %637 = vmatprep.subr.mxu0 0.0
        %638 = vmatpush1.msra.mxu0 0.0
        %639 = vmatprep.subr.mxu0 0.0
        %640 = vmatpush1.msra.mxu0 0.0
        %641 = vmatprep.subr.mxu0 0.0
        %642 = vmatpush1.msra.mxu0 0.0
        %643 = vmatprep.subr.mxu0 0.0
        %644 = vmatpush1.msra.mxu0 0.0
        %645 = vmatprep.subr.mxu0 0.0
        %646 = vmatpush1.msra.mxu0 0.0
        %647 = vmatprep.subr.mxu0 0.0
        %648 = vmatpush1.msra.mxu0 0.0
        %649 = vmatprep.subr.mxu0 0.0
        %650 = vmatpush1.msra.mxu0 0.0
        %651 = vmatprep.subr.mxu0 0.0
        %652 = vmatpush1.msra.mxu0 0.0
        %653 = vmatprep.subr.mxu0 0.0
        %654 = vmatpush1.msra.mxu0 0.0
        %655 = vmatprep.subr.mxu0 0.0
        %656 = vmatpush1.msra.mxu0 0.0
        %657 = vmatprep.subr.mxu0 0.0
        %658 = vmatpush1.msra.mxu0 0.0
        %659 = vmatprep.subr.mxu0 0.0
        %660 = vmatpush1.msra.mxu0 0.0
        %661 = vmatprep.subr.mxu0 0.0
        %662 = vmatpush1.msra.mxu0 0.0
        %663 = vmatprep.subr.mxu0 0.0
        %664 = vmatpush1.msra.mxu0 0.0
        %665 = vmatprep.subr.mxu0 0.0
        %666 = vmatpush1.msra.mxu0 0.0
        %667 = vmatprep.subr.mxu0 0.0
        %668 = vmatpush1.msra.mxu0 0.0
        %669 = vmatprep.subr.mxu0 0.0
        %670 = vmatpush1.msra.mxu0 0.0
        %671 = vmatprep.subr.mxu0 0.0
        %672 = vmatpush1.msra.mxu0 0.0
        %673 = vmatprep.subr.mxu0 0.0
        %674 = vmatpush1.msra.mxu0 0.0
        %675 = vmatprep.mubr.f32.mxu0 0.0
        %676 = vmatmul.mubr.f32.gmra.mrb[0].mxu0 %v606
        %v677 = vpop.f32.mrb[0].mxu0
        %v678 = vadd.f32 0.0, %v677
        %v679 = vpop.f32.mrb[0].mxu0
        %680 = vmatprep.mubr.f32.mxu0 0.0
        %681 = vmatmul.mubr.f32.gmra.mrb[0].mxu0 %v609
        %v682 = vpop.f32.mrb[0].mxu0
        %v683 = vadd.f32 0.0, %v682
        %v684 = vpop.f32.mrb[0].mxu0
        %685 = vdwg.mxu0
        %v686 = vld [vmem:[#allocation12] sm:$0xff]
        %v687 = vld [vmem:[#allocation12 + $0x8] sm:$0xff]
        %v688 = vld [vmem:[#allocation12 + $0x10] sm:$0xff]
        %v689 = vld [vmem:[#allocation12 + $0x18] sm:$0xff]
        %690 = vmatprep.subr.mxu0 0.0
        %691 = vmatpush1.msra.mxu0 %v686
        %692 = vmatprep.subr.mxu0 0.0
        %693 = vmatpush1.msra.mxu0 %v687
        %694 = vmatprep.subr.mxu0 0.0
        %695 = vmatpush1.msra.mxu0 %v688
        %696 = vmatprep.subr.mxu0 0.0
        %697 = vmatpush1.msra.mxu0 %v689
        %698 = vmatprep.subr.mxu0 0.0
        %699 = vmatpush1.msra.mxu0 0.0
        %700 = vmatprep.subr.mxu0 0.0
        %701 = vmatpush1.msra.mxu0 0.0
        %702 = vmatprep.subr.mxu0 0.0
        %703 = vmatpush1.msra.mxu0 0.0
        %704 = vmatprep.subr.mxu0 0.0
        %705 = vmatpush1.msra.mxu0 0.0
        %706 = vmatprep.subr.mxu0 0.0
        %707 = vmatpush1.msra.mxu0 0.0
        %708 = vmatprep.subr.mxu0 0.0
        %709 = vmatpush1.msra.mxu0 0.0
        %710 = vmatprep.subr.mxu0 0.0
        %711 = vmatpush1.msra.mxu0 0.0
        %712 = vmatprep.subr.mxu0 0.0
        %713 = vmatpush1.msra.mxu0 0.0
        %714 = vmatprep.subr.mxu0 0.0
        %715 = vmatpush1.msra.mxu0 0.0
        %716 = vmatprep.subr.mxu0 0.0
        %717 = vmatpush1.msra.mxu0 0.0
        %718 = vmatprep.subr.mxu0 0.0
        %719 = vmatpush1.msra.mxu0 0.0
        %720 = vmatprep.subr.mxu0 0.0
        %721 = vmatpush1.msra.mxu0 0.0
        %722 = vmatprep.subr.mxu0 0.0
        %723 = vmatpush1.msra.mxu0 0.0
        %724 = vmatprep.subr.mxu0 0.0
        %725 = vmatpush1.msra.mxu0 0.0
        %726 = vmatprep.subr.mxu0 0.0
        %727 = vmatpush1.msra.mxu0 0.0
        %728 = vmatprep.subr.mxu0 0.0
        %729 = vmatpush1.msra.mxu0 0.0
        %730 = vmatprep.subr.mxu0 0.0
        %731 = vmatpush1.msra.mxu0 0.0
        %732 = vmatprep.subr.mxu0 0.0
        %733 = vmatpush1.msra.mxu0 0.0
        %734 = vmatprep.subr.mxu0 0.0
        %735 = vmatpush1.msra.mxu0 0.0
        %736 = vmatprep.subr.mxu0 0.0
        %737 = vmatpush1.msra.mxu0 0.0
        %738 = vmatprep.subr.mxu0 0.0
        %739 = vmatpush1.msra.mxu0 0.0
        %740 = vmatprep.subr.mxu0 0.0
        %741 = vmatpush1.msra.mxu0 0.0
        %742 = vmatprep.subr.mxu0 0.0
        %743 = vmatpush1.msra.mxu0 0.0
        %744 = vmatprep.subr.mxu0 0.0
        %745 = vmatpush1.msra.mxu0 0.0
        %746 = vmatprep.subr.mxu0 0.0
        %747 = vmatpush1.msra.mxu0 0.0
        %748 = vmatprep.subr.mxu0 0.0
        %749 = vmatpush1.msra.mxu0 0.0
        %750 = vmatprep.subr.mxu0 0.0
        %751 = vmatpush1.msra.mxu0 0.0
        %752 = vmatprep.subr.mxu0 0.0
        %753 = vmatpush1.msra.mxu0 0.0
        %754 = vmatprep.mubr.f32.mxu0 0.0
        %755 = vmatmul.mubr.f32.gmra.mrb[0].mxu0 %v606
        %v756 = vpop.f32.mrb[0].mxu0
        %v757 = vadd.f32 0.0, %v756
        %v758 = vpop.f32.mrb[0].mxu0
        %759 = vmatprep.mubr.f32.mxu0 0.0
        %760 = vmatmul.mubr.f32.gmra.mrb[0].mxu0 %v609
        %v761 = vpop.f32.mrb[0].mxu0
        %v762 = vadd.f32 0.0, %v761
        %v763 = vpop.f32.mrb[0].mxu0
        %764 = vdwg.mxu0
        %v765 = vld [vmem:[%s447] sm:$0xff]
        %v766 = vld [vmem:[%s447 + $0x8] sm:$0xff]
        %vm767 = vcmask 64512
        %v769 = vsel %vm767, %v593, 0
        %v772 = vsel %vm767, %v598, 0
        %v775 = vsel %vm767, %v678, 0
        %v778 = vsel %vm767, %v683, 0
        %780 = vmatprep.subr.mxu0 0.0
        %781 = vmatpush1.xpose.msra.mxu0 %v775
        %782 = vmatprep.subr.mxu0 0.0
        %783 = vmatpush1.xpose.msra.mxu0 %v778
        %784 = vmatprep.subr.mxu0 0.0
        %785 = vmatpush1.xpose.msra.mxu0 0.0
        %786 = vmatprep.subr.mxu0 0.0
        %787 = vmatpush1.xpose.msra.mxu0 0.0
        %788 = vmatprep.subr.mxu0 0.0
        %789 = vmatpush1.xpose.msra.mxu0 0.0
        %790 = vmatprep.subr.mxu0 0.0
        %791 = vmatpush1.xpose.msra.mxu0 0.0
        %792 = vmatprep.subr.mxu0 0.0
        %793 = vmatpush1.xpose.msra.mxu0 0.0
        %794 = vmatprep.subr.mxu0 0.0
        %795 = vmatpush1.xpose.msra.mxu0 0.0
        %796 = vmatprep.subr.mxu0 0.0
        %797 = vmatpush1.xpose.msra.mxu0 0.0
        %798 = vmatprep.subr.mxu0 0.0
        %799 = vmatpush1.xpose.msra.mxu0 0.0
        %800 = vmatprep.subr.mxu0 0.0
        %801 = vmatpush1.xpose.msra.mxu0 0.0
        %802 = vmatprep.subr.mxu0 0.0
        %803 = vmatpush1.xpose.msra.mxu0 0.0
        %804 = vmatprep.subr.mxu0 0.0
        %805 = vmatpush1.xpose.msra.mxu0 0.0
        %806 = vmatprep.subr.mxu0 0.0
        %807 = vmatpush1.xpose.msra.mxu0 0.0
        %808 = vmatprep.subr.mxu0 0.0
        %809 = vmatpush1.xpose.msra.mxu0 0.0
        %810 = vmatprep.subr.mxu0 0.0
        %811 = vmatpush1.xpose.msra.mxu0 0.0
        %812 = vmatprep.subr.mxu0 0.0
        %813 = vmatpush1.xpose.msra.mxu0 0.0
        %814 = vmatprep.subr.mxu0 0.0
        %815 = vmatpush1.xpose.msra.mxu0 0.0
        %816 = vmatprep.subr.mxu0 0.0
        %817 = vmatpush1.xpose.msra.mxu0 0.0
        %818 = vmatprep.subr.mxu0 0.0
        %819 = vmatpush1.xpose.msra.mxu0 0.0
        %820 = vmatprep.subr.mxu0 0.0
        %821 = vmatpush1.xpose.msra.mxu0 0.0
        %822 = vmatprep.subr.mxu0 0.0
        %823 = vmatpush1.xpose.msra.mxu0 0.0
        %824 = vmatprep.subr.mxu0 0.0
        %825 = vmatpush1.xpose.msra.mxu0 0.0
        %826 = vmatprep.subr.mxu0 0.0
        %827 = vmatpush1.xpose.msra.mxu0 0.0
        %828 = vmatprep.subr.mxu0 0.0
        %829 = vmatpush1.xpose.msra.mxu0 0.0
        %830 = vmatprep.subr.mxu0 0.0
        %831 = vmatpush1.xpose.msra.mxu0 0.0
        %832 = vmatprep.subr.mxu0 0.0
        %833 = vmatpush1.xpose.msra.mxu0 0.0
        %834 = vmatprep.subr.mxu0 0.0
        %835 = vmatpush1.xpose.msra.mxu0 0.0
        %836 = vmatprep.subr.mxu0 0.0
        %837 = vmatpush1.xpose.msra.mxu0 0.0
        %838 = vmatprep.subr.mxu0 0.0
        %839 = vmatpush1.xpose.msra.mxu0 0.0
        %840 = vmatprep.subr.mxu0 0.0
        %841 = vmatpush1.xpose.msra.mxu0 0.0
        %842 = vmatprep.subr.mxu0 0.0
        %843 = vmatpush1.xpose.msra.mxu0 0.0
        %844 = vmatprep.mubr.f32.mxu0 0.0
        %845 = vmatmul.mubr.f32.gmra.mrb[0].mxu0 %v769
        %v846 = vpop.f32.mrb[0].mxu0
        %v847 = vadd.f32 %v765, %v846
        %v848 = vpop.f32.mrb[0].mxu0
        %849 = vmatprep.mubr.f32.mxu0 0.0
        %850 = vmatmul.mubr.f32.gmra.mrb[0].mxu0 %v772
        %v851 = vpop.f32.mrb[0].mxu0
        %v852 = vadd.f32 %v766, %v851
        %v853 = vpop.f32.mrb[0].mxu0
        %854 = vdwg.mxu0
        %vm855 = vcmask 130048
        %v856 = vsel %vm855, %v847, -inf
        %857 = vmax.xlane.f32.xlu0 %v856
        %v858 = vpop.xlane.xlu0 %857
        %v859 = vsel %vm855, %v852, -inf
        %860 = vmax.xlane.f32.xlu0 %v859
        %v861 = vpop.xlane.xlu0 %860
        %v862 = vsub.f32 %v847, %v858
        %v863 = vsub.f32 %v852, %v861
        %v864 = vmul.f32 %v862, 1.442695
        %v865 = vpow.pop %v864
        %v866 = vmul.f32 %v863, 1.442695
        %v867 = vpow.pop %v866
        %v868 = vsel %vm855, %v865, 0.0
        %869 = vadd.xlane.f32.xlu0 %v868
        %v870 = vpop.xlane.xlu0 %869
        %v871 = vsel %vm855, %v867, 0.0
        %872 = vadd.xlane.f32.xlu0 %v871
        %v873 = vpop.xlane.xlu0 %872
        %v874 = vrcp.pop %v870
        %v875 = vrcp.pop %v873
        %v876 = vmul.f32 %v865, %v874
        %v877 = vmul.f32 %v867, %v875
        %v879 = vsel %vm855, %v876, 0
        %v882 = vsel %vm855, %v877, 0
        %884 = vmatprep.subr.mxu0 0.0
        %885 = vmatpush1.msra.mxu0 %v757
        %886 = vmatprep.subr.mxu0 0.0
        %887 = vmatpush1.msra.mxu0 %v762
        %888 = vmatprep.subr.mxu0 0.0
        %889 = vmatpush1.msra.mxu0 0.0
        %890 = vmatprep.subr.mxu0 0.0
        %891 = vmatpush1.msra.mxu0 0.0
        %892 = vmatprep.subr.mxu0 0.0
        %893 = vmatpush1.msra.mxu0 0.0
        %894 = vmatprep.subr.mxu0 0.0
        %895 = vmatpush1.msra.mxu0 0.0
        %896 = vmatprep.subr.mxu0 0.0
        %897 = vmatpush1.msra.mxu0 0.0
        %898 = vmatprep.subr.mxu0 0.0
        %899 = vmatpush1.msra.mxu0 0.0
        %900 = vmatprep.subr.mxu0 0.0
        %901 = vmatpush1.msra.mxu0 0.0
        %902 = vmatprep.subr.mxu0 0.0
        %903 = vmatpush1.msra.mxu0 0.0
        %904 = vmatprep.subr.mxu0 0.0
        %905 = vmatpush1.msra.mxu0 0.0
        %906 = vmatprep.subr.mxu0 0.0
        %907 = vmatpush1.msra.mxu0 0.0
        %908 = vmatprep.subr.mxu0 0.0
        %909 = vmatpush1.msra.mxu0 0.0
        %910 = vmatprep.subr.mxu0 0.0
        %911 = vmatpush1.msra.mxu0 0.0
        %912 = vmatprep.subr.mxu0 0.0
        %913 = vmatpush1.msra.mxu0 0.0
        %914 = vmatprep.subr.mxu0 0.0
        %915 = vmatpush1.msra.mxu0 0.0
        %916 = vmatprep.subr.mxu0 0.0
        %917 = vmatpush1.msra.mxu0 0.0
        %918 = vmatprep.subr.mxu0 0.0
        %919 = vmatpush1.msra.mxu0 0.0
        %920 = vmatprep.subr.mxu0 0.0
        %921 = vmatpush1.msra.mxu0 0.0
        %922 = vmatprep.subr.mxu0 0.0
        %923 = vmatpush1.msra.mxu0 0.0
        %924 = vmatprep.subr.mxu0 0.0
        %925 = vmatpush1.msra.mxu0 0.0
        %926 = vmatprep.subr.mxu0 0.0
        %927 = vmatpush1.msra.mxu0 0.0
        %928 = vmatprep.subr.mxu0 0.0
        %929 = vmatpush1.msra.mxu0 0.0
        %930 = vmatprep.subr.mxu0 0.0
        %931 = vmatpush1.msra.mxu0 0.0
        %932 = vmatprep.subr.mxu0 0.0
        %933 = vmatpush1.msra.mxu0 0.0
        %934 = vmatprep.subr.mxu0 0.0
        %935 = vmatpush1.msra.mxu0 0.0
        %936 = vmatprep.subr.mxu0 0.0
        %937 = vmatpush1.msra.mxu0 0.0
        %938 = vmatprep.subr.mxu0 0.0
        %939 = vmatpush1.msra.mxu0 0.0
        %940 = vmatprep.subr.mxu0 0.0
        %941 = vmatpush1.msra.mxu0 0.0
        %942 = vmatprep.subr.mxu0 0.0
        %943 = vmatpush1.msra.mxu0 0.0
        %944 = vmatprep.subr.mxu0 0.0
        %945 = vmatpush1.msra.mxu0 0.0
        %946 = vmatprep.subr.mxu0 0.0
        %947 = vmatpush1.msra.mxu0 0.0
        %948 = vmatprep.mubr.f32.mxu0 0.0
        %949 = vmatmul.mubr.f32.gmra.mrb[0].mxu0 %v879
        %v950 = vpop.f32.mrb[0].mxu0
        %v951 = vadd.f32 0.0, %v950
        %v952 = vpop.f32.mrb[0].mxu0
        %953 = vmatprep.mubr.f32.mxu0 0.0
        %954 = vmatmul.mubr.f32.gmra.mrb[0].mxu0 %v882
        %v955 = vpop.f32.mrb[0].mxu0
        %v956 = vadd.f32 0.0, %v955
        %v957 = vpop.f32.mrb[0].mxu0
        %958 = vdwg.mxu0
        %959 = vst.msk [vmem:[#allocation2] sm:$0xff] %vm767, %v951
        %960 = vst.msk [vmem:[#allocation2 + $0x8] sm:$0xff] %vm767, %v956
        %s961 = scalar_lea.vmem %s447, 16 [#allocation8]
        %v962 = vld [vmem:[%s961] sm:$0xff]
        %v963 = vld [vmem:[%s961 + $0x8] sm:$0xff]
        %964 = vrot.lane.b32.xlu0 %v593, 120
        %v965 = vpop.permute.xlu0 %964
        %966 = vrot.lane.b32.xlu0 %v598, 120
        %v967 = vpop.permute.xlu0 %966
        %968 = vrot.lane.b32.xlu0 %v678, 120
        %v969 = vpop.permute.xlu0 %968
        %970 = vrot.lane.b32.xlu0 %v683, 120
        %v971 = vpop.permute.xlu0 %970
        %v972 = vsel %vm767, %v965, 0
        %v974 = vsel %vm767, %v967, 0
        %v976 = vsel %vm767, %v969, 0
        %v978 = vsel %vm767, %v971, 0
        %980 = vmatprep.subr.mxu0 0.0
        %981 = vmatpush1.xpose.msra.mxu0 %v976
        %982 = vmatprep.subr.mxu0 0.0
        %983 = vmatpush1.xpose.msra.mxu0 %v978
        %984 = vmatprep.subr.mxu0 0.0
        %985 = vmatpush1.xpose.msra.mxu0 0.0
        %986 = vmatprep.subr.mxu0 0.0
        %987 = vmatpush1.xpose.msra.mxu0 0.0
        %988 = vmatprep.subr.mxu0 0.0
        %989 = vmatpush1.xpose.msra.mxu0 0.0
        %990 = vmatprep.subr.mxu0 0.0
        %991 = vmatpush1.xpose.msra.mxu0 0.0
        %992 = vmatprep.subr.mxu0 0.0
        %993 = vmatpush1.xpose.msra.mxu0 0.0
        %994 = vmatprep.subr.mxu0 0.0
        %995 = vmatpush1.xpose.msra.mxu0 0.0
        %996 = vmatprep.subr.mxu0 0.0
        %997 = vmatpush1.xpose.msra.mxu0 0.0
        %998 = vmatprep.subr.mxu0 0.0
        %999 = vmatpush1.xpose.msra.mxu0 0.0
        %1000 = vmatprep.subr.mxu0 0.0
        %1001 = vmatpush1.xpose.msra.mxu0 0.0
        %1002 = vmatprep.subr.mxu0 0.0
        %1003 = vmatpush1.xpose.msra.mxu0 0.0
        %1004 = vmatprep.subr.mxu0 0.0
        %1005 = vmatpush1.xpose.msra.mxu0 0.0
        %1006 = vmatprep.subr.mxu0 0.0
        %1007 = vmatpush1.xpose.msra.mxu0 0.0
        %1008 = vmatprep.subr.mxu0 0.0
        %1009 = vmatpush1.xpose.msra.mxu0 0.0
        %1010 = vmatprep.subr.mxu0 0.0
        %1011 = vmatpush1.xpose.msra.mxu0 0.0
        %1012 = vmatprep.subr.mxu0 0.0
        %1013 = vmatpush1.xpose.msra.mxu0 0.0
        %1014 = vmatprep.subr.mxu0 0.0
        %1015 = vmatpush1.xpose.msra.mxu0 0.0
        %1016 = vmatprep.subr.mxu0 0.0
        %1017 = vmatpush1.xpose.msra.mxu0 0.0
        %1018 = vmatprep.subr.mxu0 0.0
        %1019 = vmatpush1.xpose.msra.mxu0 0.0
        %1020 = vmatprep.subr.mxu0 0.0
        %1021 = vmatpush1.xpose.msra.mxu0 0.0
        %1022 = vmatprep.subr.mxu0 0.0
        %1023 = vmatpush1.xpose.msra.mxu0 0.0
        %1024 = vmatprep.subr.mxu0 0.0
        %1025 = vmatpush1.xpose.msra.mxu0 0.0
        %1026 = vmatprep.subr.mxu0 0.0
        %1027 = vmatpush1.xpose.msra.mxu0 0.0
        %1028 = vmatprep.subr.mxu0 0.0
        %1029 = vmatpush1.xpose.msra.mxu0 0.0
        %1030 = vmatprep.subr.mxu0 0.0
        %1031 = vmatpush1.xpose.msra.mxu0 0.0
        %1032 = vmatprep.subr.mxu0 0.0
        %1033 = vmatpush1.xpose.msra.mxu0 0.0
        %1034 = vmatprep.subr.mxu0 0.0
        %1035 = vmatpush1.xpose.msra.mxu0 0.0
        %1036 = vmatprep.subr.mxu0 0.0
        %1037 = vmatpush1.xpose.msra.mxu0 0.0
        %1038 = vmatprep.subr.mxu0 0.0
        %1039 = vmatpush1.xpose.msra.mxu0 0.0
        %1040 = vmatprep.subr.mxu0 0.0
        %1041 = vmatpush1.xpose.msra.mxu0 0.0
        %1042 = vmatprep.subr.mxu0 0.0
        %1043 = vmatpush1.xpose.msra.mxu0 0.0
        %1044 = vmatprep.mubr.f32.mxu0 0.0
        %1045 = vmatmul.mubr.f32.gmra.mrb[0].mxu0 %v972
        %v1046 = vpop.f32.mrb[0].mxu0
        %v1047 = vadd.f32 %v962, %v1046
        %v1048 = vpop.f32.mrb[0].mxu0
        %1049 = vmatprep.mubr.f32.mxu0 0.0
        %1050 = vmatmul.mubr.f32.gmra.mrb[0].mxu0 %v974
        %v1051 = vpop.f32.mrb[0].mxu0
        %v1052 = vadd.f32 %v963, %v1051
        %v1053 = vpop.f32.mrb[0].mxu0
        %1054 = vdwg.mxu0
        %v1055 = vsel %vm855, %v1047, -inf
        %1056 = vmax.xlane.f32.xlu0 %v1055
        %v1057 = vpop.xlane.xlu0 %1056
        %v1058 = vsel %vm855, %v1052, -inf
        %1059 = vmax.xlane.f32.xlu0 %v1058
        %v1060 = vpop.xlane.xlu0 %1059
        %v1061 = vsub.f32 %v1047, %v1057
        %v1062 = vsub.f32 %v1052, %v1060
        %v1063 = vmul.f32 %v1061, 1.442695
        %v1064 = vpow.pop %v1063
        %v1065 = vmul.f32 %v1062, 1.442695
        %v1066 = vpow.pop %v1065
        %v1067 = vsel %vm855, %v1064, 0.0
        %1068 = vadd.xlane.f32.xlu0 %v1067
        %v1069 = vpop.xlane.xlu0 %1068
        %v1070 = vsel %vm855, %v1066, 0.0
        %1071 = vadd.xlane.f32.xlu0 %v1070
        %v1072 = vpop.xlane.xlu0 %1071
        %v1073 = vrcp.pop %v1069
        %v1074 = vrcp.pop %v1072
        %v1075 = vmul.f32 %v1064, %v1073
        %v1076 = vmul.f32 %v1066, %v1074
        %1079 = vrot.lane.b32.xlu0 %v757, 120
        %v1080 = vpop.permute.xlu0 %1079
        %1081 = vrot.lane.b32.xlu0 %v762, 120
        %v1082 = vpop.permute.xlu0 %1081
        %v1086 = vsel %vm855, %v1075, 0
        %v1089 = vsel %vm855, %v1076, 0
        %1091 = vmatprep.subr.mxu0 0.0
        %1092 = vmatpush1.msra.mxu0 %v1080
        %1093 = vmatprep.subr.mxu0 0.0
        %1094 = vmatpush1.msra.mxu0 %v1082
        %1095 = vmatprep.subr.mxu0 0.0
        %1096 = vmatpush1.msra.mxu0 0.0
        %1097 = vmatprep.subr.mxu0 0.0
        %1098 = vmatpush1.msra.mxu0 0.0
        %1099 = vmatprep.subr.mxu0 0.0
        %1100 = vmatpush1.msra.mxu0 0.0
        %1101 = vmatprep.subr.mxu0 0.0
        %1102 = vmatpush1.msra.mxu0 0.0
        %1103 = vmatprep.subr.mxu0 0.0
        %1104 = vmatpush1.msra.mxu0 0.0
        %1105 = vmatprep.subr.mxu0 0.0
        %1106 = vmatpush1.msra.mxu0 0.0
        %1107 = vmatprep.subr.mxu0 0.0
        %1108 = vmatpush1.msra.mxu0 0.0
        %1109 = vmatprep.subr.mxu0 0.0
        %1110 = vmatpush1.msra.mxu0 0.0
        %1111 = vmatprep.subr.mxu0 0.0
        %1112 = vmatpush1.msra.mxu0 0.0
        %1113 = vmatprep.subr.mxu0 0.0
        %1114 = vmatpush1.msra.mxu0 0.0
        %1115 = vmatprep.subr.mxu0 0.0
        %1116 = vmatpush1.msra.mxu0 0.0
        %1117 = vmatprep.subr.mxu0 0.0
        %1118 = vmatpush1.msra.mxu0 0.0
        %1119 = vmatprep.subr.mxu0 0.0
        %1120 = vmatpush1.msra.mxu0 0.0
        %1121 = vmatprep.subr.mxu0 0.0
        %1122 = vmatpush1.msra.mxu0 0.0
        %1123 = vmatprep.subr.mxu0 0.0
        %1124 = vmatpush1.msra.mxu0 0.0
        %1125 = vmatprep.subr.mxu0 0.0
        %1126 = vmatpush1.msra.mxu0 0.0
        %1127 = vmatprep.subr.mxu0 0.0
        %1128 = vmatpush1.msra.mxu0 0.0
        %1129 = vmatprep.subr.mxu0 0.0
        %1130 = vmatpush1.msra.mxu0 0.0
        %1131 = vmatprep.subr.mxu0 0.0
        %1132 = vmatpush1.msra.mxu0 0.0
        %1133 = vmatprep.subr.mxu0 0.0
        %1134 = vmatpush1.msra.mxu0 0.0
        %1135 = vmatprep.subr.mxu0 0.0
        %1136 = vmatpush1.msra.mxu0 0.0
        %1137 = vmatprep.subr.mxu0 0.0
        %1138 = vmatpush1.msra.mxu0 0.0
        %1139 = vmatprep.subr.mxu0 0.0
        %1140 = vmatpush1.msra.mxu0 0.0
        %1141 = vmatprep.subr.mxu0 0.0
        %1142 = vmatpush1.msra.mxu0 0.0
        %1143 = vmatprep.subr.mxu0 0.0
        %1144 = vmatpush1.msra.mxu0 0.0
        %1145 = vmatprep.subr.mxu0 0.0
        %1146 = vmatpush1.msra.mxu0 0.0
        %1147 = vmatprep.subr.mxu0 0.0
        %1148 = vmatpush1.msra.mxu0 0.0
        %1149 = vmatprep.subr.mxu0 0.0
        %1150 = vmatpush1.msra.mxu0 0.0
        %1151 = vmatprep.subr.mxu0 0.0
        %1152 = vmatpush1.msra.mxu0 0.0
        %1153 = vmatprep.subr.mxu0 0.0
        %1154 = vmatpush1.msra.mxu0 0.0
        %1155 = vmatprep.mubr.f32.mxu0 0.0
        %1156 = vmatmul.mubr.f32.gmra.mrb[0].mxu0 %v1086
        %v1157 = vpop.f32.mrb[0].mxu0
        %v1158 = vadd.f32 0.0, %v1157
        %v1159 = vpop.f32.mrb[0].mxu0
        %1160 = vmatprep.mubr.f32.mxu0 0.0
        %1161 = vmatmul.mubr.f32.gmra.mrb[0].mxu0 %v1089
        %v1162 = vpop.f32.mrb[0].mxu0
        %v1163 = vadd.f32 0.0, %v1162
        %v1164 = vpop.f32.mrb[0].mxu0
        %1165 = vdwg.mxu0
        %1168 = vrot.lane.b32.xlu0 %v1158, 8
        %v1169 = vpop.permute.xlu0 %1168
        %1170 = vrot.lane.b32.xlu0 %v1163, 8
        %v1171 = vpop.permute.xlu0 %1170
        %vm1174 = vcmask 130112
        %1175 = vst.msk [vmem:[#allocation2] sm:$0xff] %vm1174, %v1169
        %1176 = vst.msk [vmem:[#allocation2 + $0x8] sm:$0xff] %vm1174, %v1171
        %s1177 = scalar_lea.vmem %s447, 32 [#allocation8]
        %v1178 = vld [vmem:[%s1177] sm:$0xff]
        %v1179 = vld [vmem:[%s1177 + $0x8] sm:$0xff]
        %1180 = vrot.lane.b32.xlu0 %v593, 112
        %v1181 = vpop.permute.xlu0 %1180
        %1182 = vrot.lane.b32.xlu0 %v598, 112
        %v1183 = vpop.permute.xlu0 %1182
        %1184 = vrot.lane.b32.xlu0 %v678, 112
        %v1185 = vpop.permute.xlu0 %1184
        %1186 = vrot.lane.b32.xlu0 %v683, 112
        %v1187 = vpop.permute.xlu0 %1186
        %v1188 = vsel %vm767, %v1181, 0
        %v1190 = vsel %vm767, %v1183, 0
        %v1192 = vsel %vm767, %v1185, 0
        %v1194 = vsel %vm767, %v1187, 0
        %1196 = vmatprep.subr.mxu0 0.0
        %1197 = vmatpush1.xpose.msra.mxu0 %v1192
        %1198 = vmatprep.subr.mxu0 0.0
        %1199 = vmatpush1.xpose.msra.mxu0 %v1194
        %1200 = vmatprep.subr.mxu0 0.0
        %1201 = vmatpush1.xpose.msra.mxu0 0.0
        %1202 = vmatprep.subr.mxu0 0.0
        %1203 = vmatpush1.xpose.msra.mxu0 0.0
        %1204 = vmatprep.subr.mxu0 0.0
        %1205 = vmatpush1.xpose.msra.mxu0 0.0
        %1206 = vmatprep.subr.mxu0 0.0
        %1207 = vmatpush1.xpose.msra.mxu0 0.0
        %1208 = vmatprep.subr.mxu0 0.0
        %1209 = vmatpush1.xpose.msra.mxu0 0.0
        %1210 = vmatprep.subr.mxu0 0.0
        %1211 = vmatpush1.xpose.msra.mxu0 0.0
        %1212 = vmatprep.subr.mxu0 0.0
        %1213 = vmatpush1.xpose.msra.mxu0 0.0
        %1214 = vmatprep.subr.mxu0 0.0
        %1215 = vmatpush1.xpose.msra.mxu0 0.0
        %1216 = vmatprep.subr.mxu0 0.0
        %1217 = vmatpush1.xpose.msra.mxu0 0.0
        %1218 = vmatprep.subr.mxu0 0.0
        %1219 = vmatpush1.xpose.msra.mxu0 0.0
        %1220 = vmatprep.subr.mxu0 0.0
        %1221 = vmatpush1.xpose.msra.mxu0 0.0
        %1222 = vmatprep.subr.mxu0 0.0
        %1223 = vmatpush1.xpose.msra.mxu0 0.0
        %1224 = vmatprep.subr.mxu0 0.0
        %1225 = vmatpush1.xpose.msra.mxu0 0.0
        %1226 = vmatprep.subr.mxu0 0.0
        %1227 = vmatpush1.xpose.msra.mxu0 0.0
        %1228 = vmatprep.subr.mxu0 0.0
        %1229 = vmatpush1.xpose.msra.mxu0 0.0
        %1230 = vmatprep.subr.mxu0 0.0
        %1231 = vmatpush1.xpose.msra.mxu0 0.0
        %1232 = vmatprep.subr.mxu0 0.0
        %1233 = vmatpush1.xpose.msra.mxu0 0.0
        %1234 = vmatprep.subr.mxu0 0.0
        %1235 = vmatpush1.xpose.msra.mxu0 0.0
        %1236 = vmatprep.subr.mxu0 0.0
        %1237 = vmatpush1.xpose.msra.mxu0 0.0
        %1238 = vmatprep.subr.mxu0 0.0
        %1239 = vmatpush1.xpose.msra.mxu0 0.0
        %1240 = vmatprep.subr.mxu0 0.0
        %1241 = vmatpush1.xpose.msra.mxu0 0.0
        %1242 = vmatprep.subr.mxu0 0.0
        %1243 = vmatpush1.xpose.msra.mxu0 0.0
        %1244 = vmatprep.subr.mxu0 0.0
        %1245 = vmatpush1.xpose.msra.mxu0 0.0
        %1246 = vmatprep.subr.mxu0 0.0
        %1247 = vmatpush1.xpose.msra.mxu0 0.0
        %1248 = vmatprep.subr.mxu0 0.0
        %1249 = vmatpush1.xpose.msra.mxu0 0.0
        %1250 = vmatprep.subr.mxu0 0.0
        %1251 = vmatpush1.xpose.msra.mxu0 0.0
        %1252 = vmatprep.subr.mxu0 0.0
        %1253 = vmatpush1.xpose.msra.mxu0 0.0
        %1254 = vmatprep.subr.mxu0 0.0
        %1255 = vmatpush1.xpose.msra.mxu0 0.0
        %1256 = vmatprep.subr.mxu0 0.0
        %1257 = vmatpush1.xpose.msra.mxu0 0.0
        %1258 = vmatprep.subr.mxu0 0.0
        %1259 = vmatpush1.xpose.msra.mxu0 0.0
        %1260 = vmatprep.mubr.f32.mxu0 0.0
        %1261 = vmatmul.mubr.f32.gmra.mrb[0].mxu0 %v1188
        %v1262 = vpop.f32.mrb[0].mxu0
        %v1263 = vadd.f32 %v1178, %v1262
        %v1264 = vpop.f32.mrb[0].mxu0
        %1265 = vmatprep.mubr.f32.mxu0 0.0
        %1266 = vmatmul.mubr.f32.gmra.mrb[0].mxu0 %v1190
        %v1267 = vpop.f32.mrb[0].mxu0
        %v1268 = vadd.f32 %v1179, %v1267
        %v1269 = vpop.f32.mrb[0].mxu0
        %1270 = vdwg.mxu0
        %v1271 = vsel %vm855, %v1263, -inf
        %1272 = vmax.xlane.f32.xlu0 %v1271
        %v1273 = vpop.xlane.xlu0 %1272
        %v1274 = vsel %vm855, %v1268, -inf
        %1275 = vmax.xlane.f32.xlu0 %v1274
        %v1276 = vpop.xlane.xlu0 %1275
        %v1277 = vsub.f32 %v1263, %v1273
        %v1278 = vsub.f32 %v1268, %v1276
        %v1279 = vmul.f32 %v1277, 1.442695
        %v1280 = vpow.pop %v1279
        %v1281 = vmul.f32 %v1278, 1.442695
        %v1282 = vpow.pop %v1281
        %v1283 = vsel %vm855, %v1280, 0.0
        %1284 = vadd.xlane.f32.xlu0 %v1283
        %v1285 = vpop.xlane.xlu0 %1284
        %v1286 = vsel %vm855, %v1282, 0.0
        %1287 = vadd.xlane.f32.xlu0 %v1286
        %v1288 = vpop.xlane.xlu0 %1287
        %v1289 = vrcp.pop %v1285
        %v1290 = vrcp.pop %v1288
        %v1291 = vmul.f32 %v1280, %v1289
        %v1292 = vmul.f32 %v1282, %v1290
        %1293 = vrot.lane.b32.xlu0 %v757, 112
        %v1294 = vpop.permute.xlu0 %1293
        %1295 = vrot.lane.b32.xlu0 %v762, 112
        %v1296 = vpop.permute.xlu0 %1295
        %v1300 = vsel %vm855, %v1291, 0
        %v1303 = vsel %vm855, %v1292, 0
        %1305 = vmatprep.subr.mxu0 0.0
        %1306 = vmatpush1.msra.mxu0 %v1294
        %1307 = vmatprep.subr.mxu0 0.0
        %1308 = vmatpush1.msra.mxu0 %v1296
        %1309 = vmatprep.subr.mxu0 0.0
        %1310 = vmatpush1.msra.mxu0 0.0
        %1311 = vmatprep.subr.mxu0 0.0
        %1312 = vmatpush1.msra.mxu0 0.0
        %1313 = vmatprep.subr.mxu0 0.0
        %1314 = vmatpush1.msra.mxu0 0.0
        %1315 = vmatprep.subr.mxu0 0.0
        %1316 = vmatpush1.msra.mxu0 0.0
        %1317 = vmatprep.subr.mxu0 0.0
        %1318 = vmatpush1.msra.mxu0 0.0
        %1319 = vmatprep.subr.mxu0 0.0
        %1320 = vmatpush1.msra.mxu0 0.0
        %1321 = vmatprep.subr.mxu0 0.0
        %1322 = vmatpush1.msra.mxu0 0.0
        %1323 = vmatprep.subr.mxu0 0.0
        %1324 = vmatpush1.msra.mxu0 0.0
        %1325 = vmatprep.subr.mxu0 0.0
        %1326 = vmatpush1.msra.mxu0 0.0
        %1327 = vmatprep.subr.mxu0 0.0
        %1328 = vmatpush1.msra.mxu0 0.0
        %1329 = vmatprep.subr.mxu0 0.0
        %1330 = vmatpush1.msra.mxu0 0.0
        %1331 = vmatprep.subr.mxu0 0.0
        %1332 = vmatpush1.msra.mxu0 0.0
        %1333 = vmatprep.subr.mxu0 0.0
        %1334 = vmatpush1.msra.mxu0 0.0
        %1335 = vmatprep.subr.mxu0 0.0
        %1336 = vmatpush1.msra.mxu0 0.0
        %1337 = vmatprep.subr.mxu0 0.0
        %1338 = vmatpush1.msra.mxu0 0.0
        %1339 = vmatprep.subr.mxu0 0.0
        %1340 = vmatpush1.msra.mxu0 0.0
        %1341 = vmatprep.subr.mxu0 0.0
        %1342 = vmatpush1.msra.mxu0 0.0
        %1343 = vmatprep.subr.mxu0 0.0
        %1344 = vmatpush1.msra.mxu0 0.0
        %1345 = vmatprep.subr.mxu0 0.0
        %1346 = vmatpush1.msra.mxu0 0.0
        %1347 = vmatprep.subr.mxu0 0.0
        %1348 = vmatpush1.msra.mxu0 0.0
        %1349 = vmatprep.subr.mxu0 0.0
        %1350 = vmatpush1.msra.mxu0 0.0
        %1351 = vmatprep.subr.mxu0 0.0
        %1352 = vmatpush1.msra.mxu0 0.0
        %1353 = vmatprep.subr.mxu0 0.0
        %1354 = vmatpush1.msra.mxu0 0.0
        %1355 = vmatprep.subr.mxu0 0.0
        %1356 = vmatpush1.msra.mxu0 0.0
        %1357 = vmatprep.subr.mxu0 0.0
        %1358 = vmatpush1.msra.mxu0 0.0
        %1359 = vmatprep.subr.mxu0 0.0
        %1360 = vmatpush1.msra.mxu0 0.0
        %1361 = vmatprep.subr.mxu0 0.0
        %1362 = vmatpush1.msra.mxu0 0.0
        %1363 = vmatprep.subr.mxu0 0.0
        %1364 = vmatpush1.msra.mxu0 0.0
        %1365 = vmatprep.subr.mxu0 0.0
        %1366 = vmatpush1.msra.mxu0 0.0
        %1367 = vmatprep.subr.mxu0 0.0
        %1368 = vmatpush1.msra.mxu0 0.0
        %1369 = vmatprep.mubr.f32.mxu0 0.0
        %1370 = vmatmul.mubr.f32.gmra.mrb[0].mxu0 %v1300
        %v1371 = vpop.f32.mrb[0].mxu0
        %v1372 = vadd.f32 0.0, %v1371
        %v1373 = vpop.f32.mrb[0].mxu0
        %1374 = vmatprep.mubr.f32.mxu0 0.0
        %1375 = vmatmul.mubr.f32.gmra.mrb[0].mxu0 %v1303
        %v1376 = vpop.f32.mrb[0].mxu0
        %v1377 = vadd.f32 0.0, %v1376
        %v1378 = vpop.f32.mrb[0].mxu0
        %1379 = vdwg.mxu0
        %1382 = vrot.lane.b32.xlu0 %v1372, 16
        %v1383 = vpop.permute.xlu0 %1382
        %1384 = vrot.lane.b32.xlu0 %v1377, 16
        %v1385 = vpop.permute.xlu0 %1384
        %vm1388 = vcmask 195712
        %1389 = vst.msk [vmem:[#allocation2] sm:$0xff] %vm1388, %v1383
        %1390 = vst.msk [vmem:[#allocation2 + $0x8] sm:$0xff] %vm1388, %v1385
        %s1391 = scalar_lea.vmem %s447, 48 [#allocation8]
        %v1392 = vld [vmem:[%s1391] sm:$0xff]
        %v1393 = vld [vmem:[%s1391 + $0x8] sm:$0xff]
        %1394 = vrot.lane.b32.xlu0 %v593, 104
        %v1395 = vpop.permute.xlu0 %1394
        %1396 = vrot.lane.b32.xlu0 %v598, 104
        %v1397 = vpop.permute.xlu0 %1396
        %1398 = vrot.lane.b32.xlu0 %v678, 104
        %v1399 = vpop.permute.xlu0 %1398
        %1400 = vrot.lane.b32.xlu0 %v683, 104
        %v1401 = vpop.permute.xlu0 %1400
        %v1402 = vsel %vm767, %v1395, 0
        %v1404 = vsel %vm767, %v1397, 0
        %v1406 = vsel %vm767, %v1399, 0
        %v1408 = vsel %vm767, %v1401, 0
        %1410 = vmatprep.subr.mxu0 0.0
        %1411 = vmatpush1.xpose.msra.mxu0 %v1406
        %1412 = vmatprep.subr.mxu0 0.0
        %1413 = vmatpush1.xpose.msra.mxu0 %v1408
        %1414 = vmatprep.subr.mxu0 0.0
        %1415 = vmatpush1.xpose.msra.mxu0 0.0
        %1416 = vmatprep.subr.mxu0 0.0
        %1417 = vmatpush1.xpose.msra.mxu0 0.0
        %1418 = vmatprep.subr.mxu0 0.0
        %1419 = vmatpush1.xpose.msra.mxu0 0.0
        %1420 = vmatprep.subr.mxu0 0.0
        %1421 = vmatpush1.xpose.msra.mxu0 0.0
        %1422 = vmatprep.subr.mxu0 0.0
        %1423 = vmatpush1.xpose.msra.mxu0 0.0
        %1424 = vmatprep.subr.mxu0 0.0
        %1425 = vmatpush1.xpose.msra.mxu0 0.0
        %1426 = vmatprep.subr.mxu0 0.0
        %1427 = vmatpush1.xpose.msra.mxu0 0.0
        %1428 = vmatprep.subr.mxu0 0.0
        %1429 = vmatpush1.xpose.msra.mxu0 0.0
        %1430 = vmatprep.subr.mxu0 0.0
        %1431 = vmatpush1.xpose.msra.mxu0 0.0
        %1432 = vmatprep.subr.mxu0 0.0
        %1433 = vmatpush1.xpose.msra.mxu0 0.0
        %1434 = vmatprep.subr.mxu0 0.0
        %1435 = vmatpush1.xpose.msra.mxu0 0.0
        %1436 = vmatprep.subr.mxu0 0.0
        %1437 = vmatpush1.xpose.msra.mxu0 0.0
        %1438 = vmatprep.subr.mxu0 0.0
        %1439 = vmatpush1.xpose.msra.mxu0 0.0
        %1440 = vmatprep.subr.mxu0 0.0
        %1441 = vmatpush1.xpose.msra.mxu0 0.0
        %1442 = vmatprep.subr.mxu0 0.0
        %1443 = vmatpush1.xpose.msra.mxu0 0.0
        %1444 = vmatprep.subr.mxu0 0.0
        %1445 = vmatpush1.xpose.msra.mxu0 0.0
        %1446 = vmatprep.subr.mxu0 0.0
        %1447 = vmatpush1.xpose.msra.mxu0 0.0
        %1448 = vmatprep.subr.mxu0 0.0
        %1449 = vmatpush1.xpose.msra.mxu0 0.0
        %1450 = vmatprep.subr.mxu0 0.0
        %1451 = vmatpush1.xpose.msra.mxu0 0.0
        %1452 = vmatprep.subr.mxu0 0.0
        %1453 = vmatpush1.xpose.msra.mxu0 0.0
        %1454 = vmatprep.subr.mxu0 0.0
        %1455 = vmatpush1.xpose.msra.mxu0 0.0
        %1456 = vmatprep.subr.mxu0 0.0
        %1457 = vmatpush1.xpose.msra.mxu0 0.0
        %1458 = vmatprep.subr.mxu0 0.0
        %1459 = vmatpush1.xpose.msra.mxu0 0.0
        %1460 = vmatprep.subr.mxu0 0.0
        %1461 = vmatpush1.xpose.msra.mxu0 0.0
        %1462 = vmatprep.subr.mxu0 0.0
        %1463 = vmatpush1.xpose.msra.mxu0 0.0
        %1464 = vmatprep.subr.mxu0 0.0
        %1465 = vmatpush1.xpose.msra.mxu0 0.0
        %1466 = vmatprep.subr.mxu0 0.0
        %1467 = vmatpush1.xpose.msra.mxu0 0.0
        %1468 = vmatprep.subr.mxu0 0.0
        %1469 = vmatpush1.xpose.msra.mxu0 0.0
        %1470 = vmatprep.subr.mxu0 0.0
        %1471 = vmatpush1.xpose.msra.mxu0 0.0
        %1472 = vmatprep.subr.mxu0 0.0
        %1473 = vmatpush1.xpose.msra.mxu0 0.0
        %1474 = vmatprep.mubr.f32.mxu0 0.0
        %1475 = vmatmul.mubr.f32.gmra.mrb[0].mxu0 %v1402
        %v1476 = vpop.f32.mrb[0].mxu0
        %v1477 = vadd.f32 %v1392, %v1476
        %v1478 = vpop.f32.mrb[0].mxu0
        %1479 = vmatprep.mubr.f32.mxu0 0.0
        %1480 = vmatmul.mubr.f32.gmra.mrb[0].mxu0 %v1404
        %v1481 = vpop.f32.mrb[0].mxu0
        %v1482 = vadd.f32 %v1393, %v1481
        %v1483 = vpop.f32.mrb[0].mxu0
        %1484 = vdwg.mxu0
        %v1485 = vsel %vm855, %v1477, -inf
        %1486 = vmax.xlane.f32.xlu0 %v1485
        %v1487 = vpop.xlane.xlu0 %1486
        %v1488 = vsel %vm855, %v1482, -inf
        %1489 = vmax.xlane.f32.xlu0 %v1488
        %v1490 = vpop.xlane.xlu0 %1489
        %v1491 = vsub.f32 %v1477, %v1487
        %v1492 = vsub.f32 %v1482, %v1490
        %v1493 = vmul.f32 %v1491, 1.442695
        %v1494 = vpow.pop %v1493
        %v1495 = vmul.f32 %v1492, 1.442695
        %v1496 = vpow.pop %v1495
        %v1497 = vsel %vm855, %v1494, 0.0
        %1498 = vadd.xlane.f32.xlu0 %v1497
        %v1499 = vpop.xlane.xlu0 %1498
        %v1500 = vsel %vm855, %v1496, 0.0
        %1501 = vadd.xlane.f32.xlu0 %v1500
        %v1502 = vpop.xlane.xlu0 %1501
        %v1503 = vrcp.pop %v1499
        %v1504 = vrcp.pop %v1502
        %v1505 = vmul.f32 %v1494, %v1503
        %v1506 = vmul.f32 %v1496, %v1504
        %1507 = vrot.lane.b32.xlu0 %v757, 104
        %v1508 = vpop.permute.xlu0 %1507
        %1509 = vrot.lane.b32.xlu0 %v762, 104
        %v1510 = vpop.permute.xlu0 %1509
        %v1514 = vsel %vm855, %v1505, 0
        %v1517 = vsel %vm855, %v1506, 0
        %1519 = vmatprep.subr.mxu0 0.0
        %1520 = vmatpush1.msra.mxu0 %v1508
        %1521 = vmatprep.subr.mxu0 0.0
        %1522 = vmatpush1.msra.mxu0 %v1510
        %1523 = vmatprep.subr.mxu0 0.0
        %1524 = vmatpush1.msra.mxu0 0.0
        %1525 = vmatprep.subr.mxu0 0.0
        %1526 = vmatpush1.msra.mxu0 0.0
        %1527 = vmatprep.subr.mxu0 0.0
        %1528 = vmatpush1.msra.mxu0 0.0
        %1529 = vmatprep.subr.mxu0 0.0
        %1530 = vmatpush1.msra.mxu0 0.0
        %1531 = vmatprep.subr.mxu0 0.0
        %1532 = vmatpush1.msra.mxu0 0.0
        %1533 = vmatprep.subr.mxu0 0.0
        %1534 = vmatpush1.msra.mxu0 0.0
        %1535 = vmatprep.subr.mxu0 0.0
        %1536 = vmatpush1.msra.mxu0 0.0
        %1537 = vmatprep.subr.mxu0 0.0
        %1538 = vmatpush1.msra.mxu0 0.0
        %1539 = vmatprep.subr.mxu0 0.0
        %1540 = vmatpush1.msra.mxu0 0.0
        %1541 = vmatprep.subr.mxu0 0.0
        %1542 = vmatpush1.msra.mxu0 0.0
        %1543 = vmatprep.subr.mxu0 0.0
        %1544 = vmatpush1.msra.mxu0 0.0
        %1545 = vmatprep.subr.mxu0 0.0
        %1546 = vmatpush1.msra.mxu0 0.0
        %1547 = vmatprep.subr.mxu0 0.0
        %1548 = vmatpush1.msra.mxu0 0.0
        %1549 = vmatprep.subr.mxu0 0.0
        %1550 = vmatpush1.msra.mxu0 0.0
        %1551 = vmatprep.subr.mxu0 0.0
        %1552 = vmatpush1.msra.mxu0 0.0
        %1553 = vmatprep.subr.mxu0 0.0
        %1554 = vmatpush1.msra.mxu0 0.0
        %1555 = vmatprep.subr.mxu0 0.0
        %1556 = vmatpush1.msra.mxu0 0.0
        %1557 = vmatprep.subr.mxu0 0.0
        %1558 = vmatpush1.msra.mxu0 0.0
        %1559 = vmatprep.subr.mxu0 0.0
        %1560 = vmatpush1.msra.mxu0 0.0
        %1561 = vmatprep.subr.mxu0 0.0
        %1562 = vmatpush1.msra.mxu0 0.0
        %1563 = vmatprep.subr.mxu0 0.0
        %1564 = vmatpush1.msra.mxu0 0.0
        %1565 = vmatprep.subr.mxu0 0.0
        %1566 = vmatpush1.msra.mxu0 0.0
        %1567 = vmatprep.subr.mxu0 0.0
        %1568 = vmatpush1.msra.mxu0 0.0
        %1569 = vmatprep.subr.mxu0 0.0
        %1570 = vmatpush1.msra.mxu0 0.0
        %1571 = vmatprep.subr.mxu0 0.0
        %1572 = vmatpush1.msra.mxu0 0.0
        %1573 = vmatprep.subr.mxu0 0.0
        %1574 = vmatpush1.msra.mxu0 0.0
        %1575 = vmatprep.subr.mxu0 0.0
        %1576 = vmatpush1.msra.mxu0 0.0
        %1577 = vmatprep.subr.mxu0 0.0
        %1578 = vmatpush1.msra.mxu0 0.0
        %1579 = vmatprep.subr.mxu0 0.0
        %1580 = vmatpush1.msra.mxu0 0.0
        %1581 = vmatprep.subr.mxu0 0.0
        %1582 = vmatpush1.msra.mxu0 0.0
        %1583 = vmatprep.mubr.f32.mxu0 0.0
        %1584 = vmatmul.mubr.f32.gmra.mrb[0].mxu0 %v1514
        %v1585 = vpop.f32.mrb[0].mxu0
        %v1586 = vadd.f32 0.0, %v1585
        %v1587 = vpop.f32.mrb[0].mxu0
        %1588 = vmatprep.mubr.f32.mxu0 0.0
        %1589 = vmatmul.mubr.f32.gmra.mrb[0].mxu0 %v1517
        %v1590 = vpop.f32.mrb[0].mxu0
        %v1591 = vadd.f32 0.0, %v1590
        %v1592 = vpop.f32.mrb[0].mxu0
        %1593 = vdwg.mxu0
        %1596 = vrot.lane.b32.xlu0 %v1586, 24
        %v1597 = vpop.permute.xlu0 %1596
        %1598 = vrot.lane.b32.xlu0 %v1591, 24
        %v1599 = vpop.permute.xlu0 %1598
        %vm1602 = vcmask 261312
        %1603 = vst.msk [vmem:[#allocation2] sm:$0xff] %vm1602, %v1597
        %1604 = vst.msk [vmem:[#allocation2 + $0x8] sm:$0xff] %vm1602, %v1599
        %v1605 = vld [vmem:[#allocation2] sm:$0xff]
        %v1606 = vld [vmem:[#allocation2 + $0x8] sm:$0xff]
        %v1607 = vld [vmem:[#allocation14] sm:$0xff]
        %v1608 = vld [vmem:[#allocation14 + $0x8] sm:$0xff]
        %v1609 = vld [vmem:[#allocation14 + $0x10] sm:$0xff]
        %v1610 = vld [vmem:[#allocation14 + $0x18] sm:$0xff]
        %v1612 = vsel %vm519, %v1605, 0
        %v1615 = vsel %vm519, %v1606, 0
        %1617 = vmatprep.subr.mxu0 0.0
        %1618 = vmatpush1.msra.mxu0 %v1607
        %1619 = vmatprep.subr.mxu0 0.0
        %1620 = vmatpush1.msra.mxu0 %v1608
        %1621 = vmatprep.subr.mxu0 0.0
        %1622 = vmatpush1.msra.mxu0 %v1609
        %1623 = vmatprep.subr.mxu0 0.0
        %1624 = vmatpush1.msra.mxu0 %v1610
        %1625 = vmatprep.subr.mxu0 0.0
        %1626 = vmatpush1.msra.mxu0 0.0
        %1627 = vmatprep.subr.mxu0 0.0
        %1628 = vmatpush1.msra.mxu0 0.0
        %1629 = vmatprep.subr.mxu0 0.0
        %1630 = vmatpush1.msra.mxu0 0.0
        %1631 = vmatprep.subr.mxu0 0.0
        %1632 = vmatpush1.msra.mxu0 0.0
        %1633 = vmatprep.subr.mxu0 0.0
        %1634 = vmatpush1.msra.mxu0 0.0
        %1635 = vmatprep.subr.mxu0 0.0
        %1636 = vmatpush1.msra.mxu0 0.0
        %1637 = vmatprep.subr.mxu0 0.0
        %1638 = vmatpush1.msra.mxu0 0.0
        %1639 = vmatprep.subr.mxu0 0.0
        %1640 = vmatpush1.msra.mxu0 0.0
        %1641 = vmatprep.subr.mxu0 0.0
        %1642 = vmatpush1.msra.mxu0 0.0
        %1643 = vmatprep.subr.mxu0 0.0
        %1644 = vmatpush1.msra.mxu0 0.0
        %1645 = vmatprep.subr.mxu0 0.0
        %1646 = vmatpush1.msra.mxu0 0.0
        %1647 = vmatprep.subr.mxu0 0.0
        %1648 = vmatpush1.msra.mxu0 0.0
        %1649 = vmatprep.subr.mxu0 0.0
        %1650 = vmatpush1.msra.mxu0 0.0
        %1651 = vmatprep.subr.mxu0 0.0
        %1652 = vmatpush1.msra.mxu0 0.0
        %1653 = vmatprep.subr.mxu0 0.0
        %1654 = vmatpush1.msra.mxu0 0.0
        %1655 = vmatprep.subr.mxu0 0.0
        %1656 = vmatpush1.msra.mxu0 0.0
        %1657 = vmatprep.subr.mxu0 0.0
        %1658 = vmatpush1.msra.mxu0 0.0
        %1659 = vmatprep.subr.mxu0 0.0
        %1660 = vmatpush1.msra.mxu0 0.0
        %1661 = vmatprep.subr.mxu0 0.0
        %1662 = vmatpush1.msra.mxu0 0.0
        %1663 = vmatprep.subr.mxu0 0.0
        %1664 = vmatpush1.msra.mxu0 0.0
        %1665 = vmatprep.subr.mxu0 0.0
        %1666 = vmatpush1.msra.mxu0 0.0
        %1667 = vmatprep.subr.mxu0 0.0
        %1668 = vmatpush1.msra.mxu0 0.0
        %1669 = vmatprep.subr.mxu0 0.0
        %1670 = vmatpush1.msra.mxu0 0.0
        %1671 = vmatprep.subr.mxu0 0.0
        %1672 = vmatpush1.msra.mxu0 0.0
        %1673 = vmatprep.subr.mxu0 0.0
        %1674 = vmatpush1.msra.mxu0 0.0
        %1675 = vmatprep.subr.mxu0 0.0
        %1676 = vmatpush1.msra.mxu0 0.0
        %1677 = vmatprep.subr.mxu0 0.0
        %1678 = vmatpush1.msra.mxu0 0.0
        %1679 = vmatprep.subr.mxu0 0.0
        %1680 = vmatpush1.msra.mxu0 0.0
        %1681 = vmatprep.mubr.f32.mxu0 0.0
        %1682 = vmatmul.mubr.f32.gmra.mrb[0].mxu0 %v1612
        %v1683 = vpop.f32.mrb[0].mxu0
        %v1684 = vadd.f32 0.0, %v1683
        %v1685 = vpop.f32.mrb[0].mxu0
        %1686 = vmatprep.mubr.f32.mxu0 0.0
        %1687 = vmatmul.mubr.f32.gmra.mrb[0].mxu0 %v1615
        %v1688 = vpop.f32.mrb[0].mxu0
        %v1689 = vadd.f32 0.0, %v1688
        %v1690 = vpop.f32.mrb[0].mxu0
        %1691 = vdwg.mxu0
        %v1692 = vadd.f32 %v511, %v1684
        %v1693 = vadd.f32 %v512, %v1689
        %v1694 = vsel %vm519, %v1692, 0.0
        %1695 = vadd.xlane.f32.xlu0 %v1694
        %v1696 = vpop.xlane.xlu0 %1695
        %v1697 = vsel %vm519, %v1693, 0.0
        %1698 = vadd.xlane.f32.xlu0 %v1697
        %v1699 = vpop.xlane.xlu0 %1698
        %v1700 = vrcp.pop 32.0
        %v1701 = vmul.f32 %v1696, %v1700
        %v1702 = vmul.f32 %v1699, %v1700
        %v1703 = vsub.f32 %v1692, %v1701
        %v1704 = vsub.f32 %v1693, %v1702
        %v1705 = vmul.f32 %v1703, %v1703
        %v1706 = vmul.f32 %v1704, %v1704
        %v1707 = vsel %vm519, %v1705, 0.0
        %1708 = vadd.xlane.f32.xlu0 %v1707
        %v1709 = vpop.xlane.xlu0 %1708
        %v1710 = vsel %vm519, %v1706, 0.0
        %1711 = vadd.xlane.f32.xlu0 %v1710
        %v1712 = vpop.xlane.xlu0 %1711
        %v1713 = vmul.f32 %v1709, %v1700
        %v1714 = vmul.f32 %v1712, %v1700
        %v1715 = vadd.f32 %v1713, 1e-12
        %v1716 = vadd.f32 %v1714, 1e-12
        %v1717 = vrsqrt.pop %v1715
        %v1718 = vrsqrt.pop %v1716
        %v1719 = vmul.f32 %v1703, %v1717
        %v1720 = vmul.f32 %v1704, %v1718
        %v1721 = vld [vmem:[%s7] sm:$0x1]
        %v1723 = vlaneseq
        %v1724 = vshrl.u32 %v1723, 7
        %v1725 = vsub.s32 0, %v1724
        %v1726 = vrot.slane %v1721, %v1725
        %v1728 = vmul.f32 %v1719, %v1726
        %v1729 = vmul.f32 %v1720, %v1726
        %v1730 = vld [vmem:[%s8] sm:$0x1]
        %v1732 = vlaneseq
        %v1733 = vshrl.u32 %v1732, 7
        %v1734 = vsub.s32 0, %v1733
        %v1735 = vrot.slane %v1730, %v1734
        %v1737 = vadd.f32 %v1728, %v1735
        %v1738 = vadd.f32 %v1729, %v1735
        %1739 = vst.msk [vmem:[%s507] sm:$0xff] %vm519, %v1737
        %1740 = vst.msk [vmem:[%s507 + $0x8] sm:$0xff] %vm519, %v1738
        %s1741 = sand.u32 %s261, 1
        %s1742 = scalar_lea.sflag [#allocation5], %s1741
        %s1743 = sand.u32 %s261, 1
        %s1744 = smul.addr %s1743, 16
        %s1745 = scalar_lea.vmem [#allocation15], %s1744
        // Predicated region
        $region85: #{tpu_custom_call.1} parent=55 // pred_check
          %p1746 = pneg %p271
        $region86: #{tpu_custom_call.1} parent=55 // pred_check_branch
          %1748 = sbr.rel (%p1746) target = $region88
        $region87: #{tpu_custom_call.1} parent=55 // pred_region
          %s1749 = smul.u32 2, %s36
          %s1751 = ssub.s32 256, 256
          %1752 = vsyncadd %s1742, %s1751
          %s1753 = smul.addr %s35, 2
          %s1754 = sadd.s32 %s1749, %s1753
          %s1755 = smul.addr %s1754, 128
          %s1756 = scalar_lea.hbm %s9, %s1755
          %s1757 = sshll.u32 %s1745, 4
          %s1758 = int_to_ptr.vmem [resolvable:$true] %s1757
          %1763 = dma.vmem_to_hbm [thread:$0]  %s1758, 256, %s1756, %s1742, 128, 128, 8
        $region88: #{tpu_custom_call.1} parent=55 // pred_fallthru
          _
      $region56: #{tpu_custom_call.1} parent=5 // pred_fallthru
        _
      %p1764 = scmp.le.s32.totalorder 2, %s26
      // Predicated region
      $region89: #{tpu_custom_call.1} parent=5 // pred_check
        %p1765 = pneg %p1764
      $region90: #{tpu_custom_call.1} parent=5 // pred_check_branch
        %1767 = sbr.rel (%p1765) target = $region92
      $region91: #{tpu_custom_call.1} parent=5 // pred_region
        %s1768 = ssub.s32 %s26, 2
        // Predicated region
        $region93: #{tpu_custom_call.1} parent=91 // pred_check
          %p1769 = pneg %p277
        $region94: #{tpu_custom_call.1} parent=91 // pred_check_branch
          %1771 = sbr.rel (%p1769) target = $region96
        $region95: #{tpu_custom_call.1} parent=91 // pred_region
          %s1772 = sand.u32 %s262, 1
          %s1773 = scalar_lea.sflag [#allocation5], %s1772
          %s1774 = sand.u32 %s262, 1
          %s1775 = smul.addr %s1774, 16
          %s1776 = scalar_lea.vmem [#allocation15], %s1775
          %1777 = dma.done %s1773, 256
        $region96: #{tpu_custom_call.1} parent=91 // pred_fallthru
          _
      $region92: #{tpu_custom_call.1} parent=5 // pred_fallthru
        _
    $region6: #{tpu_custom_call.1} parent=1 // loop_footer
      %s30 = sadd.s32 1, %s26
    $region7: #{tpu_custom_call.1} parent=1 // loop_footer_branch
      %25 = sbr.rel target = $region3
    $region8: #{tpu_custom_call.1} parent=1 // loop_exit
      _
    %1778 = vsyncpa [#allocation4], 1
    %s1779 = scalar_lea.sflag [#allocation4], 1
    %1780 = vsyncpa %s1779, 1
    %1781 = vsyncpa [#allocation7], 1
    %s1782 = scalar_lea.sflag [#allocation7], 1
    %1783 = vsyncpa %s1782, 1
    %1784 = vsyncpa [#allocation10], 1
    %1785 = vsyncpa [#allocation13], 1
    %1786 = vsyncpa [#allocation5], 1
    %s1787 = scalar_lea.sflag [#allocation5], 1
    %1788 = vsyncpa %s1787, 1

</llo_original>
